<compile_context>
chip_gen: v7x
topology: tpu7x:2x2x1
jax: 0.10.0
libtpu: 0.0.40
codegen_flags: <defaults>
</compile_context>

<pallas_src>
import functools

import jax
import jax.numpy as jnp
from jax import lax
from jax.experimental import pallas as pl
from jax.experimental.pallas import tpu as pltpu


# ----------------------------- tile selection -------------------------------

_TM_CANDIDATES = (512, 256, 128)          # batch / sublane axis (never < 128)
_TN_CANDIDATES = (1024, 512, 256, 128)    # output (lane-dense) axis
_TK_CANDIDATES = (512, 256)               # reduction axis (smaller favors reuse)


def _round_up(x, m):
    return ((x + m - 1) // m) * m


def _pick_tile(dim, candidates):
    """Candidate minimizing padded size; ties broken toward the larger tile."""
    return min(candidates, key=lambda c: (_round_up(dim, c), -c))


def _vmem_capacity_bytes():
    """Physical VMEM capacity (fallback: conservative v7x per-TC 64 MiB)."""
    try:
        info = pltpu.get_tpu_info()
        cap = getattr(info, "vmem_capacity_bytes", None)
        if cap:
            return int(cap)
    except Exception:
        pass
    return 64 << 20


def _working_set_bytes(tm, tn, tk, in_itemsize, out_itemsize, use_acc, nbuf_in):
    x_b = nbuf_in * tm * tk * in_itemsize
    w_b = nbuf_in * tn * tk * in_itemsize
    o_b = 2 * tm * tn * out_itemsize
    a_b = tm * tn * 4 if use_acc else 0
    return x_b + w_b + o_b + a_b


# ------------------------------- kernels -------------------------------------

def _make_kernels(precision, cast_bf16):
    def _dot(x_tile, w_tile):
        if cast_bf16:
            x_tile = x_tile.astype(jnp.bfloat16)
            w_tile = w_tile.astype(jnp.bfloat16)
        # (tm, tk) x (tn, tk) -> (tm, tn): contract the K axis of both operands
        # (PyTorch weight layout, no transpose materialized).
        return lax.dot_general(
            x_tile, w_tile,
            dimension_numbers=(((1,), (1,)), ((), ())),
            preferred_element_type=jnp.float32,
            precision=precision,
        )

    def direct_kernel(x_ref, w_ref, o_ref):
        """f32 output: accumulate straight into the K-resident output block."""
        @pl.when(pl.program_id(2) == 0)
        def _():
            o_ref[...] = jnp.zeros_like(o_ref)

        o_ref[...] += _dot(x_ref[...], w_ref[...])

    def acc_kernel(x_ref, w_ref, o_ref, acc_ref):
        """Narrow-output variant (bf16/fp8 ...): f32 scratch accumulator."""
        @pl.when(pl.program_id(2) == 0)
        def _():
            acc_ref[...] = jnp.zeros_like(acc_ref)

        acc_ref[...] += _dot(x_ref[...], w_ref[...])

        @pl.when(pl.program_id(2) == pl.num_programs(2) - 1)
        def _():
            o_ref[...] = acc_ref[...].astype(o_ref.dtype)

    return direct_kernel, acc_kernel


# ------------------------------- forward -------------------------------------

@functools.partial(
    jax.jit, static_argnames=("mxu_precision", "input_buffer_count")
)
def linear_forward(x, weight, *, mxu_precision=None, input_buffer_count=None):
    """y = x @ weight.T  (no bias), matching nn.Linear(in, out, bias=False).

    x:      (M, K) = (batch, in_features)
    weight: (N, K) = (out_features, in_features)   [PyTorch layout]
    returns (M, N), dtype = x.dtype.
    mxu_precision: None (auto), "highest" (match fp32 PyTorch), "bf16"
                   (in-kernel bf16 cast, f32 accumulation), or "default".
    """
    M, K = x.shape
    N, K2 = weight.shape
    assert K == K2, "in_features mismatch between x and weight"

    out_dtype = x.dtype  # note: output dtype follows x, even for mixed inputs
    direct = out_dtype == jnp.float32

    # ---- precision policy ----
    if mxu_precision is None:
        mxu_precision = "highest" if x.dtype == jnp.float32 else "default"
    cast_bf16 = mxu_precision == "bf16"
    precision = lax.Precision.HIGHEST if mxu_precision == "highest" else None

    # ---- tile selection (generation-aware VMEM budget) ----
    tm = _pick_tile(M, _TM_CANDIDATES)
    tn = _pick_tile(N, _TN_CANDIDATES)
    tk = _pick_tile(K, _TK_CANDIDATES)

    nbuf_in = input_buffer_count if input_buffer_count else 2
    in_itemsize = max(x.dtype.itemsize, weight.dtype.itemsize)
    out_itemsize = jnp.dtype(out_dtype).itemsize

    vmem_cap = _vmem_capacity_bytes()
    budget = min(int(vmem_cap * 0.70), 100 << 20)  # ~45 MiB on v7x, <=100 MiB else

    def ws():
        return _working_set_bytes(tm, tn, tk, in_itemsize, out_itemsize,
                                  not direct, nbuf_in)

    while ws() > budget:
        if tk > _TK_CANDIDATES[-1]:
            tk //= 2
        elif tn > 128:
            tn //= 2
        elif tm > 128:
            tm //= 2
        else:
            break

    # ---- megacore: make sure at least one parallel axis has >= 2 steps ----
    if _round_up(M, tm) // tm == 1 and _round_up(N, tn) // tn == 1:
        if tn >= 256:
            tn //= 2
        elif tm >= 256:
            tm //= 2

    # ---- host-side zero-padding to tile multiples (lane-dense output) ----
    Mp, Np, Kp = _round_up(M, tm), _round_up(N, tn), _round_up(K, tk)
    if (Mp, Kp) != (M, K):
        x = jnp.pad(x, ((0, Mp - M), (0, Kp - K)))
    if (Np, Kp) != (N, K):
        weight = jnp.pad(weight, ((0, Np - N), (0, Kp - K)))

    grid = (Mp // tm, Np // tn, Kp // tk)

    direct_kernel, acc_kernel = _make_kernels(precision, cast_bf16)
    kernel = direct_kernel if direct else acc_kernel
    scratch_shapes = [] if direct else [pltpu.VMEM((tm, tn), jnp.float32)]

    if input_buffer_count:
        x_spec = pl.BlockSpec((tm, tk), lambda i, j, k: (i, k),
                              pipeline_mode=pl.Buffered(input_buffer_count))
        w_spec = pl.BlockSpec((tn, tk), lambda i, j, k: (j, k),
                              pipeline_mode=pl.Buffered(input_buffer_count))
    else:
        x_spec = pl.BlockSpec((tm, tk), lambda i, j, k: (i, k))
        w_spec = pl.BlockSpec((tn, tk), lambda i, j, k: (j, k))

    vmem_limit = int(min(budget, max(ws() + (4 << 20), 32 << 20)))
    vmem_limit = max(vmem_limit, ws() + (1 << 20))

    cost = pl.CostEstimate(
        flops=2 * M * N * K,
        transcendentals=0,
        bytes_accessed=in_itemsize * (M * K + N * K) + out_itemsize * M * N,
    )

    out = pl.pallas_call(
        kernel,
        out_shape=jax.ShapeDtypeStruct((Mp, Np), out_dtype),
        grid_spec=pltpu.PrefetchScalarGridSpec(
            num_scalar_prefetch=0,
            grid=grid,
            in_specs=[x_spec, w_spec],
            out_specs=pl.BlockSpec((tm, tn), lambda i, j, k: (i, j)),
            scratch_shapes=scratch_shapes,
        ),
        compiler_params=pltpu.CompilerParams(
            dimension_semantics=("parallel", "parallel", "arbitrary"),
            vmem_limit_bytes=vmem_limit,
        ),
        cost_estimate=cost,
    )(x, weight)

    if (Mp, Np) != (M, N):
        out = out[:M, :N]
    return out


def init_weight(key, in_features, out_features, dtype=jnp.float32):
    """Matches model.initialize_weights(): uniform(-k, k), k = 1/sqrt(in),
    weight stored PyTorch-style as (out_features, in_features)."""
    k = 1.0 / jnp.sqrt(jnp.asarray(in_features, dtype))
    return jax.random.uniform(
        key, (out_features, in_features), dtype=dtype, minval=-k, maxval=k
    )


if __name__ == "__main__":
    key = jax.random.PRNGKey(0)
    k1, k2, k3, k4, k5, k6 = jax.random.split(key, 6)

    # --- small case (single padded tile, HIGHEST f32 precision) -------------
    batch, in_features, out_features = 8, 32, 64
    x = jax.random.normal(k1, (batch, in_features), dtype=jnp.float32)
    w = init_weight(k2, in_features, out_features)

    y = jax.block_until_ready(linear_forward(x, w))
    y_ref = x @ w.T
    assert y.shape == (batch, out_features)
    assert jnp.allclose(y, y_ref, atol=1e-5, rtol=1e-5), "f32 small mismatch"

    # --- tiled case: exercises K accumulation + megacore tn split -----------
    batch2, in2, out2 = 256, 1024, 256
    x2 = jax.random.normal(k3, (batch2, in2), dtype=jnp.float32)
    w2 = init_weight(k4, in2, out2)

    y2 = jax.block_until_ready(linear_forward(x2, w2))
    y2_ref = x2 @ w2.T
    assert jnp.allclose(y2, y2_ref, atol=1e-4, rtol=1e-4), "f32 tiled mismatch"

    # --- awkward shapes: exercises zero-padding + output slicing ------------
    batch3, in3, out3 = 10, 300, 200
    x3 = jax.random.normal(k5, (batch3, in3), dtype=jnp.float32)
    w3 = init_weight(k6, in3, out3)

    y3 = jax.block_until_ready(linear_forward(x3, w3))
    y3_ref = x3 @ w3.T
    assert y3.shape == (batch3, out3)
    assert jnp.allclose(y3, y3_ref, atol=1e-5, rtol=1e-5), "padded-shape mismatch"

    # --- bf16 path (scratch f32 accumulator kernel) --------------------------
    xb = x.astype(jnp.bfloat16)
    wb = w.astype(jnp.bfloat16)
    yb = jax.block_until_ready(linear_forward(xb, wb))
    yb_ref = (xb.astype(jnp.float32) @ wb.astype(jnp.float32).T).astype(jnp.bfloat16)
    assert jnp.allclose(
        yb.astype(jnp.float32), yb_ref.astype(jnp.float32), atol=3e-2, rtol=3e-2
    ), "bf16 mismatch"

    print("KERNEL_OK")
</pallas_src>

<mosaic_0001>
module attributes {stable_mosaic.version = 11 : i64} {
  func.func @direct_kernel(%arg0: i32, %arg1: i32, %arg2: i32, %arg3: memref<128x256xf32, #tpu.memory_space<vmem>>, %arg4: memref<128x256xf32, #tpu.memory_space<vmem>>, %arg5: memref<128x128xf32, #tpu.memory_space<vmem>>) attributes {dimension_semantics = [#tpu.dimension_semantics<parallel>, #tpu.dimension_semantics<parallel>, #tpu.dimension_semantics<arbitrary>], iteration_bounds = array<i64: 1, 1, 1>, scalar_prefetch = 0 : i64, scratch_operands = 0 : i64, tpu.core_type = #tpu.core_type<tc>, window_params = [{transform_indices = @transform_0, window_bounds = array<i64: 128, 256>}, {transform_indices = @transform_1, window_bounds = array<i64: 128, 256>}, {transform_indices = @transform_2, window_bounds = array<i64: 128, 128>}]} {
    %c0_i32 = arith.constant 0 : i32
    %0 = arith.cmpi eq, %arg2, %c0_i32 : i32
    %1 = arith.extui %0 : i1 to i32
    %c0_i32_0 = arith.constant 0 : i32
    %2 = arith.cmpi ne, %1, %c0_i32_0 : i32
    scf.if %2 {
      %cst_8 = arith.constant 0.000000e+00 : f32
      %9 = vector.broadcast %cst_8 : f32 to vector<128x128xf32>
      %c0_9 = arith.constant 0 : index
      %c0_10 = arith.constant 0 : index
      %10 = vector.load %arg5[%c0_9, %c0_10] : memref<128x128xf32, #tpu.memory_space<vmem>>, vector<128x128xf32>
      tpu.vector_store %arg5[%c0_9, %c0_10], %9 {strides = array<i32>} : memref<128x128xf32, #tpu.memory_space<vmem>>, vector<128x128xf32>,
    } else {
    }
    %c0 = arith.constant 0 : index
    %c0_1 = arith.constant 0 : index
    %3 = vector.load %arg5[%c0, %c0_1] : memref<128x128xf32, #tpu.memory_space<vmem>>, vector<128x128xf32>
    %c0_2 = arith.constant 0 : index
    %c0_3 = arith.constant 0 : index
    %4 = vector.load %arg3[%c0_2, %c0_3] : memref<128x256xf32, #tpu.memory_space<vmem>>, vector<128x256xf32>
    %c0_4 = arith.constant 0 : index
    %c0_5 = arith.constant 0 : index
    %5 = vector.load %arg4[%c0_4, %c0_5] : memref<128x256xf32, #tpu.memory_space<vmem>>, vector<128x256xf32>
    %cst = arith.constant dense<0.000000e+00> : vector<128x128xf32>
    %6 = tpu.matmul %4, %5, %cst {dimension_numbers = #tpu.dot_dimension_numbers<[1], [1], [0], [0], [0, 0, 1, 0], [], []>, precision = #tpu.contract_precision<fp32>} : vector<128x256xf32>, vector<128x256xf32>, vector<128x128xf32> -> vector<128x128xf32>
    %7 = arith.addf %3, %6 : vector<128x128xf32>
    %c0_6 = arith.constant 0 : index
    %c0_7 = arith.constant 0 : index
    %8 = vector.load %arg5[%c0_6, %c0_7] : memref<128x128xf32, #tpu.memory_space<vmem>>, vector<128x128xf32>
    tpu.vector_store %arg5[%c0_6, %c0_7], %7 {strides = array<i32>} : memref<128x128xf32, #tpu.memory_space<vmem>>, vector<128x128xf32>,
    return
  }
  func.func @transform_0(%arg0: i32, %arg1: i32, %arg2: i32) -> (i32, i32) {
    %c0_i32 = arith.constant 0 : i32
    return %arg0, %arg2 : i32, i32
  }
  func.func @transform_1(%arg0: i32, %arg1: i32, %arg2: i32) -> (i32, i32) {
    %c0_i32 = arith.constant 0 : i32
    return %arg1, %arg2 : i32, i32
  }
  func.func @transform_2(%arg0: i32, %arg1: i32, %arg2: i32) -> (i32, i32) {
    %c0_i32 = arith.constant 0 : i32
    return %arg0, %arg1 : i32, i32
  }
}

</mosaic_0001>

<llo_original>
// kernel: linear_forward.1
$region0: #{linear_forward.1}
  #allocation0 [shape = 'u32[]', space=smem, size = 0x4, offset = 0x4, fixed_abs, tag = 'smem constant byte address 0x4 - core index']
  #allocation1 [shape = 'u32[144,128]{1,0:T(1,128)}', space=vmem, size = 0x12000, scoped, tag = 'internal scratch']
  %s0 = inlined_call_operand.vmem [shape: f32[128,256], index: 0, kind: input, shape index: {}]
  %s1 = inlined_call_operand.vmem [shape: f32[128,256], index: 1, kind: input, shape index: {}]
  %s2 = inlined_call_operand.vmem [shape: f32[128,128], index: 2, kind: output, shape index: {}]
  %s3 = sld [smem:[#allocation0]]
  $region22: #{linear_forward.1} parent=0
    _
  %s5 = ssub.s32 1, %s3
  %s6 = scalar_select 0, %s5, %s3
  // Predicated region
  $region2: #{linear_forward.1} parent=0 // pred_check
    _
  $region3: #{linear_forward.1} parent=0 // pred_check_branch
    %8 = sbr.rel (0) target = $region5
  $region4: #{linear_forward.1} parent=0 // pred_region
    _
  $region5: #{linear_forward.1} parent=0 // pred_fallthru
    _
  // Predicated region
  $region6: #{linear_forward.1} parent=0 // pred_check
    _
  $region7: #{linear_forward.1} parent=0 // pred_check_branch
    %10 = sbr.rel (0) target = $region9
  $region8: #{linear_forward.1} parent=0 // pred_region
    _
  $region9: #{linear_forward.1} parent=0 // pred_fallthru
    _
  %p11 = scmp.eq.s32.totalorder 0, 0
  // Predicated region
  $region10: #{linear_forward.1} parent=0 // pred_check
    %p12 = pneg %p11
  $region11: #{linear_forward.1} parent=0 // pred_check_branch
    %14 = sbr.rel (%p12) target = $region13
  $region12: #{linear_forward.1} parent=0 // pred_region
    %15 = vst [vmem:[%s2] sm:$0xff] 0.0
    %16 = vst [vmem:[%s2 + $0x8] sm:$0xff] 0.0
    %17 = vst [vmem:[%s2 + $0x10] sm:$0xff] 0.0
    %18 = vst [vmem:[%s2 + $0x18] sm:$0xff] 0.0
    %19 = vst [vmem:[%s2 + $0x20] sm:$0xff] 0.0
    %20 = vst [vmem:[%s2 + $0x28] sm:$0xff] 0.0
    %21 = vst [vmem:[%s2 + $0x30] sm:$0xff] 0.0
    %22 = vst [vmem:[%s2 + $0x38] sm:$0xff] 0.0
    %23 = vst [vmem:[%s2 + $0x40] sm:$0xff] 0.0
    %24 = vst [vmem:[%s2 + $0x48] sm:$0xff] 0.0
    %25 = vst [vmem:[%s2 + $0x50] sm:$0xff] 0.0
    %26 = vst [vmem:[%s2 + $0x58] sm:$0xff] 0.0
    %27 = vst [vmem:[%s2 + $0x60] sm:$0xff] 0.0
    %28 = vst [vmem:[%s2 + $0x68] sm:$0xff] 0.0
    %29 = vst [vmem:[%s2 + $0x70] sm:$0xff] 0.0
    %30 = vst [vmem:[%s2 + $0x78] sm:$0xff] 0.0
  $region13: #{linear_forward.1} parent=0 // pred_fallthru
    _
  %v31 = vld [vmem:[%s2] sm:$0xff]
  %v32 = vld [vmem:[%s2 + $0x8] sm:$0xff]
  %v33 = vld [vmem:[%s2 + $0x10] sm:$0xff]
  %v34 = vld [vmem:[%s2 + $0x18] sm:$0xff]
  %v35 = vld [vmem:[%s2 + $0x20] sm:$0xff]
  %v36 = vld [vmem:[%s2 + $0x28] sm:$0xff]
  %v37 = vld [vmem:[%s2 + $0x30] sm:$0xff]
  %v38 = vld [vmem:[%s2 + $0x38] sm:$0xff]
  %v39 = vld [vmem:[%s2 + $0x40] sm:$0xff]
  %v40 = vld [vmem:[%s2 + $0x48] sm:$0xff]
  %v41 = vld [vmem:[%s2 + $0x50] sm:$0xff]
  %v42 = vld [vmem:[%s2 + $0x58] sm:$0xff]
  %v43 = vld [vmem:[%s2 + $0x60] sm:$0xff]
  %v44 = vld [vmem:[%s2 + $0x68] sm:$0xff]
  %v45 = vld [vmem:[%s2 + $0x70] sm:$0xff]
  %v46 = vld [vmem:[%s2 + $0x78] sm:$0xff]
  %v47 = vld [vmem:[%s0] sm:$0xff]
  %v48 = vld [vmem:[%s0 + $0x8] sm:$0xff]
  %v49 = vld [vmem:[%s0 + $0x10] sm:$0xff]
  %v50 = vld [vmem:[%s0 + $0x18] sm:$0xff]
  %v51 = vld [vmem:[%s0 + $0x20] sm:$0xff]
  %v52 = vld [vmem:[%s0 + $0x28] sm:$0xff]
  %v53 = vld [vmem:[%s0 + $0x30] sm:$0xff]
  %v54 = vld [vmem:[%s0 + $0x38] sm:$0xff]
  %v55 = vld [vmem:[%s0 + $0x40] sm:$0xff]
  %v56 = vld [vmem:[%s0 + $0x48] sm:$0xff]
  %v57 = vld [vmem:[%s0 + $0x50] sm:$0xff]
  %v58 = vld [vmem:[%s0 + $0x58] sm:$0xff]
  %v59 = vld [vmem:[%s0 + $0x60] sm:$0xff]
  %v60 = vld [vmem:[%s0 + $0x68] sm:$0xff]
  %v61 = vld [vmem:[%s0 + $0x70] sm:$0xff]
  %v62 = vld [vmem:[%s0 + $0x78] sm:$0xff]
  %v63 = vld [vmem:[%s0 + $0x80] sm:$0xff]
  %v64 = vld [vmem:[%s0 + $0x88] sm:$0xff]
  %v65 = vld [vmem:[%s0 + $0x90] sm:$0xff]
  %v66 = vld [vmem:[%s0 + $0x98] sm:$0xff]
  %v67 = vld [vmem:[%s0 + $0xa0] sm:$0xff]
  %v68 = vld [vmem:[%s0 + $0xa8] sm:$0xff]
  %v69 = vld [vmem:[%s0 + $0xb0] sm:$0xff]
  %v70 = vld [vmem:[%s0 + $0xb8] sm:$0xff]
  %v71 = vld [vmem:[%s0 + $0xc0] sm:$0xff]
  %v72 = vld [vmem:[%s0 + $0xc8] sm:$0xff]
  %v73 = vld [vmem:[%s0 + $0xd0] sm:$0xff]
  %v74 = vld [vmem:[%s0 + $0xd8] sm:$0xff]
  %v75 = vld [vmem:[%s0 + $0xe0] sm:$0xff]
  %v76 = vld [vmem:[%s0 + $0xe8] sm:$0xff]
  %v77 = vld [vmem:[%s0 + $0xf0] sm:$0xff]
  %v78 = vld [vmem:[%s0 + $0xf8] sm:$0xff]
  %v79 = vld [vmem:[%s1] sm:$0xff]
  %v80 = vld [vmem:[%s1 + $0x8] sm:$0xff]
  %v81 = vld [vmem:[%s1 + $0x10] sm:$0xff]
  %v82 = vld [vmem:[%s1 + $0x18] sm:$0xff]
  %v83 = vld [vmem:[%s1 + $0x20] sm:$0xff]
  %v84 = vld [vmem:[%s1 + $0x28] sm:$0xff]
  %v85 = vld [vmem:[%s1 + $0x30] sm:$0xff]
  %v86 = vld [vmem:[%s1 + $0x38] sm:$0xff]
  %v87 = vld [vmem:[%s1 + $0x40] sm:$0xff]
  %v88 = vld [vmem:[%s1 + $0x48] sm:$0xff]
  %v89 = vld [vmem:[%s1 + $0x50] sm:$0xff]
  %v90 = vld [vmem:[%s1 + $0x58] sm:$0xff]
  %v91 = vld [vmem:[%s1 + $0x60] sm:$0xff]
  %v92 = vld [vmem:[%s1 + $0x68] sm:$0xff]
  %v93 = vld [vmem:[%s1 + $0x70] sm:$0xff]
  %v94 = vld [vmem:[%s1 + $0x78] sm:$0xff]
  %v95 = vld [vmem:[%s1 + $0x80] sm:$0xff]
  %v96 = vld [vmem:[%s1 + $0x88] sm:$0xff]
  %v97 = vld [vmem:[%s1 + $0x90] sm:$0xff]
  %v98 = vld [vmem:[%s1 + $0x98] sm:$0xff]
  %v99 = vld [vmem:[%s1 + $0xa0] sm:$0xff]
  %v100 = vld [vmem:[%s1 + $0xa8] sm:$0xff]
  %v101 = vld [vmem:[%s1 + $0xb0] sm:$0xff]
  %v102 = vld [vmem:[%s1 + $0xb8] sm:$0xff]
  %v103 = vld [vmem:[%s1 + $0xc0] sm:$0xff]
  %v104 = vld [vmem:[%s1 + $0xc8] sm:$0xff]
  %v105 = vld [vmem:[%s1 + $0xd0] sm:$0xff]
  %v106 = vld [vmem:[%s1 + $0xd8] sm:$0xff]
  %v107 = vld [vmem:[%s1 + $0xe0] sm:$0xff]
  %v108 = vld [vmem:[%s1 + $0xe8] sm:$0xff]
  %v109 = vld [vmem:[%s1 + $0xf0] sm:$0xff]
  %v110 = vld [vmem:[%s1 + $0xf8] sm:$0xff]
  %v111 = vand.u32 %v80, 4294901760
  %112 = vmatprep.subr.mxu0 %v111
  %v113 = vand.u32 %v79, 4294901760
  %114 = vmatpush1.xpose.msra.mxu0 %v113
  %v115 = vand.u32 %v82, 4294901760
  %116 = vmatprep.subr.mxu0 %v115
  %v117 = vand.u32 %v81, 4294901760
  %118 = vmatpush1.xpose.msra.mxu0 %v117
  %v119 = vand.u32 %v84, 4294901760
  %120 = vmatprep.subr.mxu0 %v119
  %v121 = vand.u32 %v83, 4294901760
  %122 = vmatpush1.xpose.msra.mxu0 %v121
  %v123 = vand.u32 %v86, 4294901760
  %124 = vmatprep.subr.mxu0 %v123
  %v125 = vand.u32 %v85, 4294901760
  %126 = vmatpush1.xpose.msra.mxu0 %v125
  %v127 = vand.u32 %v88, 4294901760
  %128 = vmatprep.subr.mxu0 %v127
  %v129 = vand.u32 %v87, 4294901760
  %130 = vmatpush1.xpose.msra.mxu0 %v129
  %v131 = vand.u32 %v90, 4294901760
  %132 = vmatprep.subr.mxu0 %v131
  %v133 = vand.u32 %v89, 4294901760
  %134 = vmatpush1.xpose.msra.mxu0 %v133
  %v135 = vand.u32 %v92, 4294901760
  %136 = vmatprep.subr.mxu0 %v135
  %v137 = vand.u32 %v91, 4294901760
  %138 = vmatpush1.xpose.msra.mxu0 %v137
  %v139 = vand.u32 %v94, 4294901760
  %140 = vmatprep.subr.mxu0 %v139
  %v141 = vand.u32 %v93, 4294901760
  %142 = vmatpush1.xpose.msra.mxu0 %v141
  %v143 = vand.u32 %v96, 4294901760
  %144 = vmatprep.subr.mxu0 %v143
  %v145 = vand.u32 %v95, 4294901760
  %146 = vmatpush1.xpose.msra.mxu0 %v145
  %v147 = vand.u32 %v98, 4294901760
  %148 = vmatprep.subr.mxu0 %v147
  %v149 = vand.u32 %v97, 4294901760
  %150 = vmatpush1.xpose.msra.mxu0 %v149
  %v151 = vand.u32 %v100, 4294901760
  %152 = vmatprep.subr.mxu0 %v151
  %v153 = vand.u32 %v99, 4294901760
  %154 = vmatpush1.xpose.msra.mxu0 %v153
  %v155 = vand.u32 %v102, 4294901760
  %156 = vmatprep.subr.mxu0 %v155
  %v157 = vand.u32 %v101, 4294901760
  %158 = vmatpush1.xpose.msra.mxu0 %v157
  %v159 = vand.u32 %v104, 4294901760
  %160 = vmatprep.subr.mxu0 %v159
  %v161 = vand.u32 %v103, 4294901760
  %162 = vmatpush1.xpose.msra.mxu0 %v161
  %v163 = vand.u32 %v106, 4294901760
  %164 = vmatprep.subr.mxu0 %v163
  %v165 = vand.u32 %v105, 4294901760
  %166 = vmatpush1.xpose.msra.mxu0 %v165
  %v167 = vand.u32 %v108, 4294901760
  %168 = vmatprep.subr.mxu0 %v167
  %v169 = vand.u32 %v107, 4294901760
  %170 = vmatpush1.xpose.msra.mxu0 %v169
  %v171 = vand.u32 %v110, 4294901760
  %172 = vmatprep.subr.mxu0 %v171
  %v173 = vand.u32 %v109, 4294901760
  %174 = vmatpush1.xpose.msra.mxu0 %v173
  %175 = vmatprep.subr.mxu0 0.0
  %176 = vmatpush1.xpose.msra.mxu0 0.0
  %177 = vmatprep.subr.mxu0 0.0
  %178 = vmatpush1.xpose.msra.mxu0 0.0
  %179 = vmatprep.subr.mxu0 0.0
  %180 = vmatpush1.xpose.msra.mxu0 0.0
  %181 = vmatprep.subr.mxu0 0.0
  %182 = vmatpush1.xpose.msra.mxu0 0.0
  %183 = vmatprep.subr.mxu0 0.0
  %184 = vmatpush1.xpose.msra.mxu0 0.0
  %185 = vmatprep.subr.mxu0 0.0
  %186 = vmatpush1.xpose.msra.mxu0 0.0
  %187 = vmatprep.subr.mxu0 0.0
  %188 = vmatpush1.xpose.msra.mxu0 0.0
  %189 = vmatprep.subr.mxu0 0.0
  %190 = vmatpush1.xpose.msra.mxu0 0.0
  %191 = vmatprep.subr.mxu0 0.0
  %192 = vmatpush1.xpose.msra.mxu0 0.0
  %193 = vmatprep.subr.mxu0 0.0
  %194 = vmatpush1.xpose.msra.mxu0 0.0
  %195 = vmatprep.subr.mxu0 0.0
  %196 = vmatpush1.xpose.msra.mxu0 0.0
  %197 = vmatprep.subr.mxu0 0.0
  %198 = vmatpush1.xpose.msra.mxu0 0.0
  %199 = vmatprep.subr.mxu0 0.0
  %200 = vmatpush1.xpose.msra.mxu0 0.0
  %201 = vmatprep.subr.mxu0 0.0
  %202 = vmatpush1.xpose.msra.mxu0 0.0
  %203 = vmatprep.subr.mxu0 0.0
  %204 = vmatpush1.xpose.msra.mxu0 0.0
  %205 = vmatprep.subr.mxu0 0.0
  %206 = vmatpush1.xpose.msra.mxu0 0.0
  %v207 = vand.u32 %v48, 4294901760
  %v208 = vsub.f32 %v48, %v207
  %v209 = vand.u32 %v208, 4294901760
  %v210 = vsub.f32 %v208, %v209
  %v211 = vand.u32 %v210, 4294901760
  %212 = vmatprep.mubr.f32.mxu0 %v211
  %v213 = vand.u32 %v47, 4294901760
  %v214 = vsub.f32 %v47, %v213
  %v215 = vand.u32 %v214, 4294901760
  %v216 = vsub.f32 %v214, %v215
  %v217 = vand.u32 %v216, 4294901760
  %218 = vmatmul.mubr.f32.gmra.mrb[0].mxu0 %v217
  %v219 = vpop.f32.mrb[0].mxu0
  %v220 = vadd.f32 0.0, %v219
  %v221 = vpop.f32.mrb[0].mxu0
  %v222 = vand.u32 %v50, 4294901760
  %v223 = vsub.f32 %v50, %v222
  %v224 = vand.u32 %v223, 4294901760
  %v225 = vsub.f32 %v223, %v224
  %v226 = vand.u32 %v225, 4294901760
  %227 = vmatprep.mubr.f32.mxu0 %v226
  %v228 = vand.u32 %v49, 4294901760
  %v229 = vsub.f32 %v49, %v228
  %v230 = vand.u32 %v229, 4294901760
  %v231 = vsub.f32 %v229, %v230
  %v232 = vand.u32 %v231, 4294901760
  %233 = vmatmul.mubr.f32.gmra.mrb[0].mxu0 %v232
  %v234 = vpop.f32.mrb[0].mxu0
  %v235 = vadd.f32 0.0, %v234
  %v236 = vpop.f32.mrb[0].mxu0
  %v237 = vand.u32 %v52, 4294901760
  %v238 = vsub.f32 %v52, %v237
  %v239 = vand.u32 %v238, 4294901760
  %v240 = vsub.f32 %v238, %v239
  %v241 = vand.u32 %v240, 4294901760
  %242 = vmatprep.mubr.f32.mxu0 %v241
  %v243 = vand.u32 %v51, 4294901760
  %v244 = vsub.f32 %v51, %v243
  %v245 = vand.u32 %v244, 4294901760
  %v246 = vsub.f32 %v244, %v245
  %v247 = vand.u32 %v246, 4294901760
  %248 = vmatmul.mubr.f32.gmra.mrb[0].mxu0 %v247
  %v249 = vpop.f32.mrb[0].mxu0
  %v250 = vadd.f32 0.0, %v249
  %v251 = vpop.f32.mrb[0].mxu0
  %v252 = vand.u32 %v54, 4294901760
  %v253 = vsub.f32 %v54, %v252
  %v254 = vand.u32 %v253, 4294901760
  %v255 = vsub.f32 %v253, %v254
  %v256 = vand.u32 %v255, 4294901760
  %257 = vmatprep.mubr.f32.mxu0 %v256
  %v258 = vand.u32 %v53, 4294901760
  %v259 = vsub.f32 %v53, %v258
  %v260 = vand.u32 %v259, 4294901760
  %v261 = vsub.f32 %v259, %v260
  %v262 = vand.u32 %v261, 4294901760
  %263 = vmatmul.mubr.f32.gmra.mrb[0].mxu0 %v262
  %v264 = vpop.f32.mrb[0].mxu0
  %v265 = vadd.f32 0.0, %v264
  %v266 = vpop.f32.mrb[0].mxu0
  %v267 = vand.u32 %v56, 4294901760
  %v268 = vsub.f32 %v56, %v267
  %v269 = vand.u32 %v268, 4294901760
  %v270 = vsub.f32 %v268, %v269
  %v271 = vand.u32 %v270, 4294901760
  %272 = vmatprep.mubr.f32.mxu0 %v271
  %v273 = vand.u32 %v55, 4294901760
  %v274 = vsub.f32 %v55, %v273
  %v275 = vand.u32 %v274, 4294901760
  %v276 = vsub.f32 %v274, %v275
  %v277 = vand.u32 %v276, 4294901760
  %278 = vmatmul.mubr.f32.gmra.mrb[0].mxu0 %v277
  %v279 = vpop.f32.mrb[0].mxu0
  %v280 = vadd.f32 0.0, %v279
  %v281 = vpop.f32.mrb[0].mxu0
  %v282 = vand.u32 %v58, 4294901760
  %v283 = vsub.f32 %v58, %v282
  %v284 = vand.u32 %v283, 4294901760
  %v285 = vsub.f32 %v283, %v284
  %v286 = vand.u32 %v285, 4294901760
  %287 = vmatprep.mubr.f32.mxu0 %v286
  %v288 = vand.u32 %v57, 4294901760
  %v289 = vsub.f32 %v57, %v288
  %v290 = vand.u32 %v289, 4294901760
  %v291 = vsub.f32 %v289, %v290
  %v292 = vand.u32 %v291, 4294901760
  %293 = vmatmul.mubr.f32.gmra.mrb[0].mxu0 %v292
  %v294 = vpop.f32.mrb[0].mxu0
  %v295 = vadd.f32 0.0, %v294
  %v296 = vpop.f32.mrb[0].mxu0
  %v297 = vand.u32 %v60, 4294901760
  %v298 = vsub.f32 %v60, %v297
  %v299 = vand.u32 %v298, 4294901760
  %v300 = vsub.f32 %v298, %v299
  %v301 = vand.u32 %v300, 4294901760
  %302 = vmatprep.mubr.f32.mxu0 %v301
  %v303 = vand.u32 %v59, 4294901760
  %v304 = vsub.f32 %v59, %v303
  %v305 = vand.u32 %v304, 4294901760
  %v306 = vsub.f32 %v304, %v305
  %v307 = vand.u32 %v306, 4294901760
  %308 = vmatmul.mubr.f32.gmra.mrb[0].mxu0 %v307
  %v309 = vpop.f32.mrb[0].mxu0
  %v310 = vadd.f32 0.0, %v309
  %v311 = vpop.f32.mrb[0].mxu0
  %v312 = vand.u32 %v62, 4294901760
  %v313 = vsub.f32 %v62, %v312
  %v314 = vand.u32 %v313, 4294901760
  %v315 = vsub.f32 %v313, %v314
  %v316 = vand.u32 %v315, 4294901760
  %317 = vmatprep.mubr.f32.mxu0 %v316
  %v318 = vand.u32 %v61, 4294901760
  %v319 = vsub.f32 %v61, %v318
  %v320 = vand.u32 %v319, 4294901760
  %v321 = vsub.f32 %v319, %v320
  %v322 = vand.u32 %v321, 4294901760
  %323 = vmatmul.mubr.f32.gmra.mrb[0].mxu0 %v322
  %v324 = vpop.f32.mrb[0].mxu0
  %v325 = vadd.f32 0.0, %v324
  %v326 = vpop.f32.mrb[0].mxu0
  %v327 = vand.u32 %v64, 4294901760
  %v328 = vsub.f32 %v64, %v327
  %v329 = vand.u32 %v328, 4294901760
  %v330 = vsub.f32 %v328, %v329
  %v331 = vand.u32 %v330, 4294901760
  %332 = vmatprep.mubr.f32.mxu0 %v331
  %v333 = vand.u32 %v63, 4294901760
  %v334 = vsub.f32 %v63, %v333
  %v335 = vand.u32 %v334, 4294901760
  %v336 = vsub.f32 %v334, %v335
  %v337 = vand.u32 %v336, 4294901760
  %338 = vmatmul.mubr.f32.gmra.mrb[0].mxu0 %v337
  %v339 = vpop.f32.mrb[0].mxu0
  %v340 = vadd.f32 0.0, %v339
  %v341 = vpop.f32.mrb[0].mxu0
  %v342 = vand.u32 %v66, 4294901760
  %v343 = vsub.f32 %v66, %v342
  %v344 = vand.u32 %v343, 4294901760
  %v345 = vsub.f32 %v343, %v344
  %v346 = vand.u32 %v345, 4294901760
  %347 = vmatprep.mubr.f32.mxu0 %v346
  %v348 = vand.u32 %v65, 4294901760
  %v349 = vsub.f32 %v65, %v348
  %v350 = vand.u32 %v349, 4294901760
  %v351 = vsub.f32 %v349, %v350
  %v352 = vand.u32 %v351, 4294901760
  %353 = vmatmul.mubr.f32.gmra.mrb[0].mxu0 %v352
  %v354 = vpop.f32.mrb[0].mxu0
  %v355 = vadd.f32 0.0, %v354
  %v356 = vpop.f32.mrb[0].mxu0
  %v357 = vand.u32 %v68, 4294901760
  %v358 = vsub.f32 %v68, %v357
  %v359 = vand.u32 %v358, 4294901760
  %v360 = vsub.f32 %v358, %v359
  %v361 = vand.u32 %v360, 4294901760
  %362 = vmatprep.mubr.f32.mxu0 %v361
  %v363 = vand.u32 %v67, 4294901760
  %v364 = vsub.f32 %v67, %v363
  %v365 = vand.u32 %v364, 4294901760
  %v366 = vsub.f32 %v364, %v365
  %v367 = vand.u32 %v366, 4294901760
  %368 = vmatmul.mubr.f32.gmra.mrb[0].mxu0 %v367
  %v369 = vpop.f32.mrb[0].mxu0
  %v370 = vadd.f32 0.0, %v369
  %v371 = vpop.f32.mrb[0].mxu0
  %v372 = vand.u32 %v70, 4294901760
  %v373 = vsub.f32 %v70, %v372
  %v374 = vand.u32 %v373, 4294901760
  %v375 = vsub.f32 %v373, %v374
  %v376 = vand.u32 %v375, 4294901760
  %377 = vmatprep.mubr.f32.mxu0 %v376
  %v378 = vand.u32 %v69, 4294901760
  %v379 = vsub.f32 %v69, %v378
  %v380 = vand.u32 %v379, 4294901760
  %v381 = vsub.f32 %v379, %v380
  %v382 = vand.u32 %v381, 4294901760
  %383 = vmatmul.mubr.f32.gmra.mrb[0].mxu0 %v382
  %v384 = vpop.f32.mrb[0].mxu0
  %v385 = vadd.f32 0.0, %v384
  %v386 = vpop.f32.mrb[0].mxu0
  %v387 = vand.u32 %v72, 4294901760
  %v388 = vsub.f32 %v72, %v387
  %v389 = vand.u32 %v388, 4294901760
  %v390 = vsub.f32 %v388, %v389
  %v391 = vand.u32 %v390, 4294901760
  %392 = vmatprep.mubr.f32.mxu0 %v391
  %v393 = vand.u32 %v71, 4294901760
  %v394 = vsub.f32 %v71, %v393
  %v395 = vand.u32 %v394, 4294901760
  %v396 = vsub.f32 %v394, %v395
  %v397 = vand.u32 %v396, 4294901760
  %398 = vmatmul.mubr.f32.gmra.mrb[0].mxu0 %v397
  %v399 = vpop.f32.mrb[0].mxu0
  %v400 = vadd.f32 0.0, %v399
  %v401 = vpop.f32.mrb[0].mxu0
  %v402 = vand.u32 %v74, 4294901760
  %v403 = vsub.f32 %v74, %v402
  %v404 = vand.u32 %v403, 4294901760
  %v405 = vsub.f32 %v403, %v404
  %v406 = vand.u32 %v405, 4294901760
  %407 = vmatprep.mubr.f32.mxu0 %v406
  %v408 = vand.u32 %v73, 4294901760
  %v409 = vsub.f32 %v73, %v408
  %v410 = vand.u32 %v409, 4294901760
  %v411 = vsub.f32 %v409, %v410
  %v412 = vand.u32 %v411, 4294901760
  %413 = vmatmul.mubr.f32.gmra.mrb[0].mxu0 %v412
  %v414 = vpop.f32.mrb[0].mxu0
  %v415 = vadd.f32 0.0, %v414
  %v416 = vpop.f32.mrb[0].mxu0
  %v417 = vand.u32 %v76, 4294901760
  %v418 = vsub.f32 %v76, %v417
  %v419 = vand.u32 %v418, 4294901760
  %v420 = vsub.f32 %v418, %v419
  %v421 = vand.u32 %v420, 4294901760
  %422 = vmatprep.mubr.f32.mxu0 %v421
  %v423 = vand.u32 %v75, 4294901760
  %v424 = vsub.f32 %v75, %v423
  %v425 = vand.u32 %v424, 4294901760
  %v426 = vsub.f32 %v424, %v425
  %v427 = vand.u32 %v426, 4294901760
  %428 = vmatmul.mubr.f32.gmra.mrb[0].mxu0 %v427
  %v429 = vpop.f32.mrb[0].mxu0
  %v430 = vadd.f32 0.0, %v429
  %v431 = vpop.f32.mrb[0].mxu0
  %v432 = vand.u32 %v78, 4294901760
  %v433 = vsub.f32 %v78, %v432
  %v434 = vand.u32 %v433, 4294901760
  %v435 = vsub.f32 %v433, %v434
  %v436 = vand.u32 %v435, 4294901760
  %437 = vmatprep.mubr.f32.mxu0 %v436
  %v438 = vand.u32 %v77, 4294901760
  %v439 = vsub.f32 %v77, %v438
  %v440 = vand.u32 %v439, 4294901760
  %v441 = vsub.f32 %v439, %v440
  %v442 = vand.u32 %v441, 4294901760
  %443 = vmatmul.mubr.f32.gmra.mrb[0].mxu0 %v442
  %v444 = vpop.f32.mrb[0].mxu0
  %v445 = vadd.f32 0.0, %v444
  %v446 = vpop.f32.mrb[0].mxu0
  %447 = vdwg.mxu0
  %v448 = vand.u32 %v80, 4294901760
  %v449 = vsub.f32 %v80, %v448
  %v450 = vand.u32 %v449, 4294901760
  %v451 = vsub.f32 %v449, %v450
  %v452 = vand.u32 %v451, 4294901760
  %453 = vmatprep.subr.mxu0 %v452
  %v454 = vand.u32 %v79, 4294901760
  %v455 = vsub.f32 %v79, %v454
  %v456 = vand.u32 %v455, 4294901760
  %v457 = vsub.f32 %v455, %v456
  %v458 = vand.u32 %v457, 4294901760
  %459 = vmatpush1.xpose.msra.mxu0 %v458
  %v460 = vand.u32 %v82, 4294901760
  %v461 = vsub.f32 %v82, %v460
  %v462 = vand.u32 %v461, 4294901760
  %v463 = vsub.f32 %v461, %v462
  %v464 = vand.u32 %v463, 4294901760
  %465 = vmatprep.subr.mxu0 %v464
  %v466 = vand.u32 %v81, 4294901760
  %v467 = vsub.f32 %v81, %v466
  %v468 = vand.u32 %v467, 4294901760
  %v469 = vsub.f32 %v467, %v468
  %v470 = vand.u32 %v469, 4294901760
  %471 = vmatpush1.xpose.msra.mxu0 %v470
  %v472 = vand.u32 %v84, 4294901760
  %v473 = vsub.f32 %v84, %v472
  %v474 = vand.u32 %v473, 4294901760
  %v475 = vsub.f32 %v473, %v474
  %v476 = vand.u32 %v475, 4294901760
  %477 = vmatprep.subr.mxu0 %v476
  %v478 = vand.u32 %v83, 4294901760
  %v479 = vsub.f32 %v83, %v478
  %v480 = vand.u32 %v479, 4294901760
  %v481 = vsub.f32 %v479, %v480
  %v482 = vand.u32 %v481, 4294901760
  %483 = vmatpush1.xpose.msra.mxu0 %v482
  %v484 = vand.u32 %v86, 4294901760
  %v485 = vsub.f32 %v86, %v484
  %v486 = vand.u32 %v485, 4294901760
  %v487 = vsub.f32 %v485, %v486
  %v488 = vand.u32 %v487, 4294901760
  %489 = vmatprep.subr.mxu0 %v488
  %v490 = vand.u32 %v85, 4294901760
  %v491 = vsub.f32 %v85, %v490
  %v492 = vand.u32 %v491, 4294901760
  %v493 = vsub.f32 %v491, %v492
  %v494 = vand.u32 %v493, 4294901760
  %495 = vmatpush1.xpose.msra.mxu0 %v494
  %v496 = vand.u32 %v88, 4294901760
  %v497 = vsub.f32 %v88, %v496
  %v498 = vand.u32 %v497, 4294901760
  %v499 = vsub.f32 %v497, %v498
  %v500 = vand.u32 %v499, 4294901760
  %501 = vmatprep.subr.mxu0 %v500
  %v502 = vand.u32 %v87, 4294901760
  %v503 = vsub.f32 %v87, %v502
  %v504 = vand.u32 %v503, 4294901760
  %v505 = vsub.f32 %v503, %v504
  %v506 = vand.u32 %v505, 4294901760
  %507 = vmatpush1.xpose.msra.mxu0 %v506
  %v508 = vand.u32 %v90, 4294901760
  %v509 = vsub.f32 %v90, %v508
  %v510 = vand.u32 %v509, 4294901760
  %v511 = vsub.f32 %v509, %v510
  %v512 = vand.u32 %v511, 4294901760
  %513 = vmatprep.subr.mxu0 %v512
  %v514 = vand.u32 %v89, 4294901760
  %v515 = vsub.f32 %v89, %v514
  %v516 = vand.u32 %v515, 4294901760
  %v517 = vsub.f32 %v515, %v516
  %v518 = vand.u32 %v517, 4294901760
  %519 = vmatpush1.xpose.msra.mxu0 %v518
  %v520 = vand.u32 %v92, 4294901760
  %v521 = vsub.f32 %v92, %v520
  %v522 = vand.u32 %v521, 4294901760
  %v523 = vsub.f32 %v521, %v522
  %v524 = vand.u32 %v523, 4294901760
  %525 = vmatprep.subr.mxu0 %v524
  %v526 = vand.u32 %v91, 4294901760
  %v527 = vsub.f32 %v91, %v526
  %v528 = vand.u32 %v527, 4294901760
  %v529 = vsub.f32 %v527, %v528
  %v530 = vand.u32 %v529, 4294901760
  %531 = vmatpush1.xpose.msra.mxu0 %v530
  %v532 = vand.u32 %v94, 4294901760
  %v533 = vsub.f32 %v94, %v532
  %v534 = vand.u32 %v533, 4294901760
  %v535 = vsub.f32 %v533, %v534
  %v536 = vand.u32 %v535, 4294901760
  %537 = vmatprep.subr.mxu0 %v536
  %v538 = vand.u32 %v93, 4294901760
  %v539 = vsub.f32 %v93, %v538
  %v540 = vand.u32 %v539, 4294901760
  %v541 = vsub.f32 %v539, %v540
  %v542 = vand.u32 %v541, 4294901760
  %543 = vmatpush1.xpose.msra.mxu0 %v542
  %v544 = vand.u32 %v96, 4294901760
  %v545 = vsub.f32 %v96, %v544
  %v546 = vand.u32 %v545, 4294901760
  %v547 = vsub.f32 %v545, %v546
  %v548 = vand.u32 %v547, 4294901760
  %549 = vmatprep.subr.mxu0 %v548
  %v550 = vand.u32 %v95, 4294901760
  %v551 = vsub.f32 %v95, %v550
  %v552 = vand.u32 %v551, 4294901760
  %v553 = vsub.f32 %v551, %v552
  %v554 = vand.u32 %v553, 4294901760
  %555 = vmatpush1.xpose.msra.mxu0 %v554
  %v556 = vand.u32 %v98, 4294901760
  %v557 = vsub.f32 %v98, %v556
  %v558 = vand.u32 %v557, 4294901760
  %v559 = vsub.f32 %v557, %v558
  %v560 = vand.u32 %v559, 4294901760
  %561 = vmatprep.subr.mxu0 %v560
  %v562 = vand.u32 %v97, 4294901760
  %v563 = vsub.f32 %v97, %v562
  %v564 = vand.u32 %v563, 4294901760
  %v565 = vsub.f32 %v563, %v564
  %v566 = vand.u32 %v565, 4294901760
  %567 = vmatpush1.xpose.msra.mxu0 %v566
  %v568 = vand.u32 %v100, 4294901760
  %v569 = vsub.f32 %v100, %v568
  %v570 = vand.u32 %v569, 4294901760
  %v571 = vsub.f32 %v569, %v570
  %v572 = vand.u32 %v571, 4294901760
  %573 = vmatprep.subr.mxu0 %v572
  %v574 = vand.u32 %v99, 4294901760
  %v575 = vsub.f32 %v99, %v574
  %v576 = vand.u32 %v575, 4294901760
  %v577 = vsub.f32 %v575, %v576
  %v578 = vand.u32 %v577, 4294901760
  %579 = vmatpush1.xpose.msra.mxu0 %v578
  %v580 = vand.u32 %v102, 4294901760
  %v581 = vsub.f32 %v102, %v580
  %v582 = vand.u32 %v581, 4294901760
  %v583 = vsub.f32 %v581, %v582
  %v584 = vand.u32 %v583, 4294901760
  %585 = vmatprep.subr.mxu0 %v584
  %v586 = vand.u32 %v101, 4294901760
  %v587 = vsub.f32 %v101, %v586
  %v588 = vand.u32 %v587, 4294901760
  %v589 = vsub.f32 %v587, %v588
  %v590 = vand.u32 %v589, 4294901760
  %591 = vmatpush1.xpose.msra.mxu0 %v590
  %v592 = vand.u32 %v104, 4294901760
  %v593 = vsub.f32 %v104, %v592
  %v594 = vand.u32 %v593, 4294901760
  %v595 = vsub.f32 %v593, %v594
  %v596 = vand.u32 %v595, 4294901760
  %597 = vmatprep.subr.mxu0 %v596
  %v598 = vand.u32 %v103, 4294901760
  %v599 = vsub.f32 %v103, %v598
  %v600 = vand.u32 %v599, 4294901760
  %v601 = vsub.f32 %v599, %v600
  %v602 = vand.u32 %v601, 4294901760
  %603 = vmatpush1.xpose.msra.mxu0 %v602
  %v604 = vand.u32 %v106, 4294901760
  %v605 = vsub.f32 %v106, %v604
  %v606 = vand.u32 %v605, 4294901760
  %v607 = vsub.f32 %v605, %v606
  %v608 = vand.u32 %v607, 4294901760
  %609 = vmatprep.subr.mxu0 %v608
  %v610 = vand.u32 %v105, 4294901760
  %v611 = vsub.f32 %v105, %v610
  %v612 = vand.u32 %v611, 4294901760
  %v613 = vsub.f32 %v611, %v612
  %v614 = vand.u32 %v613, 4294901760
  %615 = vmatpush1.xpose.msra.mxu0 %v614
  %v616 = vand.u32 %v108, 4294901760
  %v617 = vsub.f32 %v108, %v616
  %v618 = vand.u32 %v617, 4294901760
  %v619 = vsub.f32 %v617, %v618
  %v620 = vand.u32 %v619, 4294901760
  %621 = vmatprep.subr.mxu0 %v620
  %v622 = vand.u32 %v107, 4294901760
  %v623 = vsub.f32 %v107, %v622
  %v624 = vand.u32 %v623, 4294901760
  %v625 = vsub.f32 %v623, %v624
  %v626 = vand.u32 %v625, 4294901760
  %627 = vmatpush1.xpose.msra.mxu0 %v626
  %v628 = vand.u32 %v110, 4294901760
  %v629 = vsub.f32 %v110, %v628
  %v630 = vand.u32 %v629, 4294901760
  %v631 = vsub.f32 %v629, %v630
  %v632 = vand.u32 %v631, 4294901760
  %633 = vmatprep.subr.mxu0 %v632
  %v634 = vand.u32 %v109, 4294901760
  %v635 = vsub.f32 %v109, %v634
  %v636 = vand.u32 %v635, 4294901760
  %v637 = vsub.f32 %v635, %v636
  %v638 = vand.u32 %v637, 4294901760
  %639 = vmatpush1.xpose.msra.mxu0 %v638
  %640 = vmatprep.subr.mxu0 0.0
  %641 = vmatpush1.xpose.msra.mxu0 0.0
  %642 = vmatprep.subr.mxu0 0.0
  %643 = vmatpush1.xpose.msra.mxu0 0.0
  %644 = vmatprep.subr.mxu0 0.0
  %645 = vmatpush1.xpose.msra.mxu0 0.0
  %646 = vmatprep.subr.mxu0 0.0
  %647 = vmatpush1.xpose.msra.mxu0 0.0
  %648 = vmatprep.subr.mxu0 0.0
  %649 = vmatpush1.xpose.msra.mxu0 0.0
  %650 = vmatprep.subr.mxu0 0.0
  %651 = vmatpush1.xpose.msra.mxu0 0.0
  %652 = vmatprep.subr.mxu0 0.0
  %653 = vmatpush1.xpose.msra.mxu0 0.0
  %654 = vmatprep.subr.mxu0 0.0
  %655 = vmatpush1.xpose.msra.mxu0 0.0
  %656 = vmatprep.subr.mxu0 0.0
  %657 = vmatpush1.xpose.msra.mxu0 0.0
  %658 = vmatprep.subr.mxu0 0.0
  %659 = vmatpush1.xpose.msra.mxu0 0.0
  %660 = vmatprep.subr.mxu0 0.0
  %661 = vmatpush1.xpose.msra.mxu0 0.0
  %662 = vmatprep.subr.mxu0 0.0
  %663 = vmatpush1.xpose.msra.mxu0 0.0
  %664 = vmatprep.subr.mxu0 0.0
  %665 = vmatpush1.xpose.msra.mxu0 0.0
  %666 = vmatprep.subr.mxu0 0.0
  %667 = vmatpush1.xpose.msra.mxu0 0.0
  %668 = vmatprep.subr.mxu0 0.0
  %669 = vmatpush1.xpose.msra.mxu0 0.0
  %670 = vmatprep.subr.mxu0 0.0
  %671 = vmatpush1.xpose.msra.mxu0 0.0
  %v672 = vand.u32 %v48, 4294901760
  %673 = vmatprep.mubr.f32.mxu0 %v672
  %v674 = vand.u32 %v47, 4294901760
  %675 = vmatmul.mubr.f32.gmra.mrb[0].mxu0 %v674
  %v676 = vpop.f32.mrb[0].mxu0
  %v677 = vadd.f32 %v220, %v676
  %v678 = vpop.f32.mrb[0].mxu0
  %v679 = vand.u32 %v50, 4294901760
  %680 = vmatprep.mubr.f32.mxu0 %v679
  %v681 = vand.u32 %v49, 4294901760
  %682 = vmatmul.mubr.f32.gmra.mrb[0].mxu0 %v681
  %v683 = vpop.f32.mrb[0].mxu0
  %v684 = vadd.f32 %v235, %v683
  %v685 = vpop.f32.mrb[0].mxu0
  %v686 = vand.u32 %v52, 4294901760
  %687 = vmatprep.mubr.f32.mxu0 %v686
  %v688 = vand.u32 %v51, 4294901760
  %689 = vmatmul.mubr.f32.gmra.mrb[0].mxu0 %v688
  %v690 = vpop.f32.mrb[0].mxu0
  %v691 = vadd.f32 %v250, %v690
  %v692 = vpop.f32.mrb[0].mxu0
  %v693 = vand.u32 %v54, 4294901760
  %694 = vmatprep.mubr.f32.mxu0 %v693
  %v695 = vand.u32 %v53, 4294901760
  %696 = vmatmul.mubr.f32.gmra.mrb[0].mxu0 %v695
  %v697 = vpop.f32.mrb[0].mxu0
  %v698 = vadd.f32 %v265, %v697
  %v699 = vpop.f32.mrb[0].mxu0
  %v700 = vand.u32 %v56, 4294901760
  %701 = vmatprep.mubr.f32.mxu0 %v700
  %v702 = vand.u32 %v55, 4294901760
  %703 = vmatmul.mubr.f32.gmra.mrb[0].mxu0 %v702
  %v704 = vpop.f32.mrb[0].mxu0
  %v705 = vadd.f32 %v280, %v704
  %v706 = vpop.f32.mrb[0].mxu0
  %v707 = vand.u32 %v58, 4294901760
  %708 = vmatprep.mubr.f32.mxu0 %v707
  %v709 = vand.u32 %v57, 4294901760
  %710 = vmatmul.mubr.f32.gmra.mrb[0].mxu0 %v709
  %v711 = vpop.f32.mrb[0].mxu0
  %v712 = vadd.f32 %v295, %v711
  %v713 = vpop.f32.mrb[0].mxu0
  %v714 = vand.u32 %v60, 4294901760
  %715 = vmatprep.mubr.f32.mxu0 %v714
  %v716 = vand.u32 %v59, 4294901760
  %717 = vmatmul.mubr.f32.gmra.mrb[0].mxu0 %v716
  %v718 = vpop.f32.mrb[0].mxu0
  %v719 = vadd.f32 %v310, %v718
  %v720 = vpop.f32.mrb[0].mxu0
  %v721 = vand.u32 %v62, 4294901760
  %722 = vmatprep.mubr.f32.mxu0 %v721
  %v723 = vand.u32 %v61, 4294901760
  %724 = vmatmul.mubr.f32.gmra.mrb[0].mxu0 %v723
  %v725 = vpop.f32.mrb[0].mxu0
  %v726 = vadd.f32 %v325, %v725
  %v727 = vpop.f32.mrb[0].mxu0
  %v728 = vand.u32 %v64, 4294901760
  %729 = vmatprep.mubr.f32.mxu0 %v728
  %v730 = vand.u32 %v63, 4294901760
  %731 = vmatmul.mubr.f32.gmra.mrb[0].mxu0 %v730
  %v732 = vpop.f32.mrb[0].mxu0
  %v733 = vadd.f32 %v340, %v732
  %v734 = vpop.f32.mrb[0].mxu0
  %v735 = vand.u32 %v66, 4294901760
  %736 = vmatprep.mubr.f32.mxu0 %v735
  %v737 = vand.u32 %v65, 4294901760
  %738 = vmatmul.mubr.f32.gmra.mrb[0].mxu0 %v737
  %v739 = vpop.f32.mrb[0].mxu0
  %v740 = vadd.f32 %v355, %v739
  %v741 = vpop.f32.mrb[0].mxu0
  %v742 = vand.u32 %v68, 4294901760
  %743 = vmatprep.mubr.f32.mxu0 %v742
  %v744 = vand.u32 %v67, 4294901760
  %745 = vmatmul.mubr.f32.gmra.mrb[0].mxu0 %v744
  %v746 = vpop.f32.mrb[0].mxu0
  %v747 = vadd.f32 %v370, %v746
  %v748 = vpop.f32.mrb[0].mxu0
  %v749 = vand.u32 %v70, 4294901760
  %750 = vmatprep.mubr.f32.mxu0 %v749
  %v751 = vand.u32 %v69, 4294901760
  %752 = vmatmul.mubr.f32.gmra.mrb[0].mxu0 %v751
  %v753 = vpop.f32.mrb[0].mxu0
  %v754 = vadd.f32 %v385, %v753
  %v755 = vpop.f32.mrb[0].mxu0
  %v756 = vand.u32 %v72, 4294901760
  %757 = vmatprep.mubr.f32.mxu0 %v756
  %v758 = vand.u32 %v71, 4294901760
  %759 = vmatmul.mubr.f32.gmra.mrb[0].mxu0 %v758
  %v760 = vpop.f32.mrb[0].mxu0
  %v761 = vadd.f32 %v400, %v760
  %v762 = vpop.f32.mrb[0].mxu0
  %v763 = vand.u32 %v74, 4294901760
  %764 = vmatprep.mubr.f32.mxu0 %v763
  %v765 = vand.u32 %v73, 4294901760
  %766 = vmatmul.mubr.f32.gmra.mrb[0].mxu0 %v765
  %v767 = vpop.f32.mrb[0].mxu0
  %v768 = vadd.f32 %v415, %v767
  %v769 = vpop.f32.mrb[0].mxu0
  %v770 = vand.u32 %v76, 4294901760
  %771 = vmatprep.mubr.f32.mxu0 %v770
  %v772 = vand.u32 %v75, 4294901760
  %773 = vmatmul.mubr.f32.gmra.mrb[0].mxu0 %v772
  %v774 = vpop.f32.mrb[0].mxu0
  %v775 = vadd.f32 %v430, %v774
  %v776 = vpop.f32.mrb[0].mxu0
  %v777 = vand.u32 %v78, 4294901760
  %778 = vmatprep.mubr.f32.mxu0 %v777
  %v779 = vand.u32 %v77, 4294901760
  %780 = vmatmul.mubr.f32.gmra.mrb[0].mxu0 %v779
  %v781 = vpop.f32.mrb[0].mxu0
  %v782 = vadd.f32 %v445, %v781
  %v783 = vpop.f32.mrb[0].mxu0
  %784 = vdwg.mxu0
  %v785 = vand.u32 %v80, 4294901760
  %v786 = vsub.f32 %v80, %v785
  %787 = vmatprep.subr.mxu0 %v786
  %v788 = vand.u32 %v79, 4294901760
  %v789 = vsub.f32 %v79, %v788
  %790 = vmatpush1.xpose.msra.mxu0 %v789
  %v791 = vand.u32 %v82, 4294901760
  %v792 = vsub.f32 %v82, %v791
  %793 = vmatprep.subr.mxu0 %v792
  %v794 = vand.u32 %v81, 4294901760
  %v795 = vsub.f32 %v81, %v794
  %796 = vmatpush1.xpose.msra.mxu0 %v795
  %v797 = vand.u32 %v84, 4294901760
  %v798 = vsub.f32 %v84, %v797
  %799 = vmatprep.subr.mxu0 %v798
  %v800 = vand.u32 %v83, 4294901760
  %v801 = vsub.f32 %v83, %v800
  %802 = vmatpush1.xpose.msra.mxu0 %v801
  %v803 = vand.u32 %v86, 4294901760
  %v804 = vsub.f32 %v86, %v803
  %805 = vmatprep.subr.mxu0 %v804
  %v806 = vand.u32 %v85, 4294901760
  %v807 = vsub.f32 %v85, %v806
  %808 = vmatpush1.xpose.msra.mxu0 %v807
  %v809 = vand.u32 %v88, 4294901760
  %v810 = vsub.f32 %v88, %v809
  %811 = vmatprep.subr.mxu0 %v810
  %v812 = vand.u32 %v87, 4294901760
  %v813 = vsub.f32 %v87, %v812
  %814 = vmatpush1.xpose.msra.mxu0 %v813
  %v815 = vand.u32 %v90, 4294901760
  %v816 = vsub.f32 %v90, %v815
  %817 = vmatprep.subr.mxu0 %v816
  %v818 = vand.u32 %v89, 4294901760
  %v819 = vsub.f32 %v89, %v818
  %820 = vmatpush1.xpose.msra.mxu0 %v819
  %v821 = vand.u32 %v92, 4294901760
  %v822 = vsub.f32 %v92, %v821
  %823 = vmatprep.subr.mxu0 %v822
  %v824 = vand.u32 %v91, 4294901760
  %v825 = vsub.f32 %v91, %v824
  %826 = vmatpush1.xpose.msra.mxu0 %v825
  %v827 = vand.u32 %v94, 4294901760
  %v828 = vsub.f32 %v94, %v827
  %829 = vmatprep.subr.mxu0 %v828
  %v830 = vand.u32 %v93, 4294901760
  %v831 = vsub.f32 %v93, %v830
  %832 = vmatpush1.xpose.msra.mxu0 %v831
  %v833 = vand.u32 %v96, 4294901760
  %v834 = vsub.f32 %v96, %v833
  %835 = vmatprep.subr.mxu0 %v834
  %v836 = vand.u32 %v95, 4294901760
  %v837 = vsub.f32 %v95, %v836
  %838 = vmatpush1.xpose.msra.mxu0 %v837
  %v839 = vand.u32 %v98, 4294901760
  %v840 = vsub.f32 %v98, %v839
  %841 = vmatprep.subr.mxu0 %v840
  %v842 = vand.u32 %v97, 4294901760
  %v843 = vsub.f32 %v97, %v842
  %844 = vmatpush1.xpose.msra.mxu0 %v843
  %v845 = vand.u32 %v100, 4294901760
  %v846 = vsub.f32 %v100, %v845
  %847 = vmatprep.subr.mxu0 %v846
  %v848 = vand.u32 %v99, 4294901760
  %v849 = vsub.f32 %v99, %v848
  %850 = vmatpush1.xpose.msra.mxu0 %v849
  %v851 = vand.u32 %v102, 4294901760
  %v852 = vsub.f32 %v102, %v851
  %853 = vmatprep.subr.mxu0 %v852
  %v854 = vand.u32 %v101, 4294901760
  %v855 = vsub.f32 %v101, %v854
  %856 = vmatpush1.xpose.msra.mxu0 %v855
  %v857 = vand.u32 %v104, 4294901760
  %v858 = vsub.f32 %v104, %v857
  %859 = vmatprep.subr.mxu0 %v858
  %v860 = vand.u32 %v103, 4294901760
  %v861 = vsub.f32 %v103, %v860
  %862 = vmatpush1.xpose.msra.mxu0 %v861
  %v863 = vand.u32 %v106, 4294901760
  %v864 = vsub.f32 %v106, %v863
  %865 = vmatprep.subr.mxu0 %v864
  %v866 = vand.u32 %v105, 4294901760
  %v867 = vsub.f32 %v105, %v866
  %868 = vmatpush1.xpose.msra.mxu0 %v867
  %v869 = vand.u32 %v108, 4294901760
  %v870 = vsub.f32 %v108, %v869
  %871 = vmatprep.subr.mxu0 %v870
  %v872 = vand.u32 %v107, 4294901760
  %v873 = vsub.f32 %v107, %v872
  %874 = vmatpush1.xpose.msra.mxu0 %v873
  %v875 = vand.u32 %v110, 4294901760
  %v876 = vsub.f32 %v110, %v875
  %877 = vmatprep.subr.mxu0 %v876
  %v878 = vand.u32 %v109, 4294901760
  %v879 = vsub.f32 %v109, %v878
  %880 = vmatpush1.xpose.msra.mxu0 %v879
  %881 = vmatprep.subr.mxu0 0.0
  %882 = vmatpush1.xpose.msra.mxu0 0.0
  %883 = vmatprep.subr.mxu0 0.0
  %884 = vmatpush1.xpose.msra.mxu0 0.0
  %885 = vmatprep.subr.mxu0 0.0
  %886 = vmatpush1.xpose.msra.mxu0 0.0
  %887 = vmatprep.subr.mxu0 0.0
  %888 = vmatpush1.xpose.msra.mxu0 0.0
  %889 = vmatprep.subr.mxu0 0.0
  %890 = vmatpush1.xpose.msra.mxu0 0.0
  %891 = vmatprep.subr.mxu0 0.0
  %892 = vmatpush1.xpose.msra.mxu0 0.0
  %893 = vmatprep.subr.mxu0 0.0
  %894 = vmatpush1.xpose.msra.mxu0 0.0
  %895 = vmatprep.subr.mxu0 0.0
  %896 = vmatpush1.xpose.msra.mxu0 0.0
  %897 = vmatprep.subr.mxu0 0.0
  %898 = vmatpush1.xpose.msra.mxu0 0.0
  %899 = vmatprep.subr.mxu0 0.0
  %900 = vmatpush1.xpose.msra.mxu0 0.0
  %901 = vmatprep.subr.mxu0 0.0
  %902 = vmatpush1.xpose.msra.mxu0 0.0
  %903 = vmatprep.subr.mxu0 0.0
  %904 = vmatpush1.xpose.msra.mxu0 0.0
  %905 = vmatprep.subr.mxu0 0.0
  %906 = vmatpush1.xpose.msra.mxu0 0.0
  %907 = vmatprep.subr.mxu0 0.0
  %908 = vmatpush1.xpose.msra.mxu0 0.0
  %909 = vmatprep.subr.mxu0 0.0
  %910 = vmatpush1.xpose.msra.mxu0 0.0
  %911 = vmatprep.subr.mxu0 0.0
  %912 = vmatpush1.xpose.msra.mxu0 0.0
  %v913 = vand.u32 %v48, 4294901760
  %v914 = vsub.f32 %v48, %v913
  %915 = vmatprep.mubr.f32.mxu0 %v914
  %v916 = vand.u32 %v47, 4294901760
  %v917 = vsub.f32 %v47, %v916
  %918 = vmatmul.mubr.f32.gmra.mrb[0].mxu0 %v917
  %v919 = vpop.f32.mrb[0].mxu0
  %v920 = vadd.f32 %v677, %v919
  %v921 = vpop.f32.mrb[0].mxu0
  %v922 = vand.u32 %v50, 4294901760
  %v923 = vsub.f32 %v50, %v922
  %924 = vmatprep.mubr.f32.mxu0 %v923
  %v925 = vand.u32 %v49, 4294901760
  %v926 = vsub.f32 %v49, %v925
  %927 = vmatmul.mubr.f32.gmra.mrb[0].mxu0 %v926
  %v928 = vpop.f32.mrb[0].mxu0
  %v929 = vadd.f32 %v684, %v928
  %v930 = vpop.f32.mrb[0].mxu0
  %v931 = vand.u32 %v52, 4294901760
  %v932 = vsub.f32 %v52, %v931
  %933 = vmatprep.mubr.f32.mxu0 %v932
  %v934 = vand.u32 %v51, 4294901760
  %v935 = vsub.f32 %v51, %v934
  %936 = vmatmul.mubr.f32.gmra.mrb[0].mxu0 %v935
  %v937 = vpop.f32.mrb[0].mxu0
  %v938 = vadd.f32 %v691, %v937
  %v939 = vpop.f32.mrb[0].mxu0
  %v940 = vand.u32 %v54, 4294901760
  %v941 = vsub.f32 %v54, %v940
  %942 = vmatprep.mubr.f32.mxu0 %v941
  %v943 = vand.u32 %v53, 4294901760
  %v944 = vsub.f32 %v53, %v943
  %945 = vmatmul.mubr.f32.gmra.mrb[0].mxu0 %v944
  %v946 = vpop.f32.mrb[0].mxu0
  %v947 = vadd.f32 %v698, %v946
  %v948 = vpop.f32.mrb[0].mxu0
  %v949 = vand.u32 %v56, 4294901760
  %v950 = vsub.f32 %v56, %v949
  %951 = vmatprep.mubr.f32.mxu0 %v950
  %v952 = vand.u32 %v55, 4294901760
  %v953 = vsub.f32 %v55, %v952
  %954 = vmatmul.mubr.f32.gmra.mrb[0].mxu0 %v953
  %v955 = vpop.f32.mrb[0].mxu0
  %v956 = vadd.f32 %v705, %v955
  %v957 = vpop.f32.mrb[0].mxu0
  %v958 = vand.u32 %v58, 4294901760
  %v959 = vsub.f32 %v58, %v958
  %960 = vmatprep.mubr.f32.mxu0 %v959
  %v961 = vand.u32 %v57, 4294901760
  %v962 = vsub.f32 %v57, %v961
  %963 = vmatmul.mubr.f32.gmra.mrb[0].mxu0 %v962
  %v964 = vpop.f32.mrb[0].mxu0
  %v965 = vadd.f32 %v712, %v964
  %v966 = vpop.f32.mrb[0].mxu0
  %v967 = vand.u32 %v60, 4294901760
  %v968 = vsub.f32 %v60, %v967
  %969 = vmatprep.mubr.f32.mxu0 %v968
  %v970 = vand.u32 %v59, 4294901760
  %v971 = vsub.f32 %v59, %v970
  %972 = vmatmul.mubr.f32.gmra.mrb[0].mxu0 %v971
  %v973 = vpop.f32.mrb[0].mxu0
  %v974 = vadd.f32 %v719, %v973
  %v975 = vpop.f32.mrb[0].mxu0
  %v976 = vand.u32 %v62, 4294901760
  %v977 = vsub.f32 %v62, %v976
  %978 = vmatprep.mubr.f32.mxu0 %v977
  %v979 = vand.u32 %v61, 4294901760
  %v980 = vsub.f32 %v61, %v979
  %981 = vmatmul.mubr.f32.gmra.mrb[0].mxu0 %v980
  %v982 = vpop.f32.mrb[0].mxu0
  %v983 = vadd.f32 %v726, %v982
  %v984 = vpop.f32.mrb[0].mxu0
  %v985 = vand.u32 %v64, 4294901760
  %v986 = vsub.f32 %v64, %v985
  %987 = vmatprep.mubr.f32.mxu0 %v986
  %v988 = vand.u32 %v63, 4294901760
  %v989 = vsub.f32 %v63, %v988
  %990 = vmatmul.mubr.f32.gmra.mrb[0].mxu0 %v989
  %v991 = vpop.f32.mrb[0].mxu0
  %v992 = vadd.f32 %v733, %v991
  %v993 = vpop.f32.mrb[0].mxu0
  %v994 = vand.u32 %v66, 4294901760
  %v995 = vsub.f32 %v66, %v994
  %996 = vmatprep.mubr.f32.mxu0 %v995
  %v997 = vand.u32 %v65, 4294901760
  %v998 = vsub.f32 %v65, %v997
  %999 = vmatmul.mubr.f32.gmra.mrb[0].mxu0 %v998
  %v1000 = vpop.f32.mrb[0].mxu0
  %v1001 = vadd.f32 %v740, %v1000
  %v1002 = vpop.f32.mrb[0].mxu0
  %v1003 = vand.u32 %v68, 4294901760
  %v1004 = vsub.f32 %v68, %v1003
  %1005 = vmatprep.mubr.f32.mxu0 %v1004
  %v1006 = vand.u32 %v67, 4294901760
  %v1007 = vsub.f32 %v67, %v1006
  %1008 = vmatmul.mubr.f32.gmra.mrb[0].mxu0 %v1007
  %v1009 = vpop.f32.mrb[0].mxu0
  %v1010 = vadd.f32 %v747, %v1009
  %v1011 = vpop.f32.mrb[0].mxu0
  %v1012 = vand.u32 %v70, 4294901760
  %v1013 = vsub.f32 %v70, %v1012
  %1014 = vmatprep.mubr.f32.mxu0 %v1013
  %v1015 = vand.u32 %v69, 4294901760
  %v1016 = vsub.f32 %v69, %v1015
  %1017 = vmatmul.mubr.f32.gmra.mrb[0].mxu0 %v1016
  %v1018 = vpop.f32.mrb[0].mxu0
  %v1019 = vadd.f32 %v754, %v1018
  %v1020 = vpop.f32.mrb[0].mxu0
  %v1021 = vand.u32 %v72, 4294901760
  %v1022 = vsub.f32 %v72, %v1021
  %1023 = vmatprep.mubr.f32.mxu0 %v1022
  %v1024 = vand.u32 %v71, 4294901760
  %v1025 = vsub.f32 %v71, %v1024
  %1026 = vmatmul.mubr.f32.gmra.mrb[0].mxu0 %v1025
  %v1027 = vpop.f32.mrb[0].mxu0
  %v1028 = vadd.f32 %v761, %v1027
  %v1029 = vpop.f32.mrb[0].mxu0
  %v1030 = vand.u32 %v74, 4294901760
  %v1031 = vsub.f32 %v74, %v1030
  %1032 = vmatprep.mubr.f32.mxu0 %v1031
  %v1033 = vand.u32 %v73, 4294901760
  %v1034 = vsub.f32 %v73, %v1033
  %1035 = vmatmul.mubr.f32.gmra.mrb[0].mxu0 %v1034
  %v1036 = vpop.f32.mrb[0].mxu0
  %v1037 = vadd.f32 %v768, %v1036
  %v1038 = vpop.f32.mrb[0].mxu0
  %v1039 = vand.u32 %v76, 4294901760
  %v1040 = vsub.f32 %v76, %v1039
  %1041 = vmatprep.mubr.f32.mxu0 %v1040
  %v1042 = vand.u32 %v75, 4294901760
  %v1043 = vsub.f32 %v75, %v1042
  %1044 = vmatmul.mubr.f32.gmra.mrb[0].mxu0 %v1043
  %v1045 = vpop.f32.mrb[0].mxu0
  %v1046 = vadd.f32 %v775, %v1045
  %v1047 = vpop.f32.mrb[0].mxu0
  %v1048 = vand.u32 %v78, 4294901760
  %v1049 = vsub.f32 %v78, %v1048
  %1050 = vmatprep.mubr.f32.mxu0 %v1049
  %v1051 = vand.u32 %v77, 4294901760
  %v1052 = vsub.f32 %v77, %v1051
  %1053 = vmatmul.mubr.f32.gmra.mrb[0].mxu0 %v1052
  %v1054 = vpop.f32.mrb[0].mxu0
  %v1055 = vadd.f32 %v782, %v1054
  %v1056 = vpop.f32.mrb[0].mxu0
  %1057 = vdwg.mxu0
  %v1058 = vand.u32 %v80, 4294901760
  %1059 = vmatprep.subr.mxu0 %v1058
  %v1060 = vand.u32 %v79, 4294901760
  %1061 = vmatpush1.xpose.msra.mxu0 %v1060
  %v1062 = vand.u32 %v82, 4294901760
  %1063 = vmatprep.subr.mxu0 %v1062
  %v1064 = vand.u32 %v81, 4294901760
  %1065 = vmatpush1.xpose.msra.mxu0 %v1064
  %v1066 = vand.u32 %v84, 4294901760
  %1067 = vmatprep.subr.mxu0 %v1066
  %v1068 = vand.u32 %v83, 4294901760
  %1069 = vmatpush1.xpose.msra.mxu0 %v1068
  %v1070 = vand.u32 %v86, 4294901760
  %1071 = vmatprep.subr.mxu0 %v1070
  %v1072 = vand.u32 %v85, 4294901760
  %1073 = vmatpush1.xpose.msra.mxu0 %v1072
  %v1074 = vand.u32 %v88, 4294901760
  %1075 = vmatprep.subr.mxu0 %v1074
  %v1076 = vand.u32 %v87, 4294901760
  %1077 = vmatpush1.xpose.msra.mxu0 %v1076
  %v1078 = vand.u32 %v90, 4294901760
  %1079 = vmatprep.subr.mxu0 %v1078
  %v1080 = vand.u32 %v89, 4294901760
  %1081 = vmatpush1.xpose.msra.mxu0 %v1080
  %v1082 = vand.u32 %v92, 4294901760
  %1083 = vmatprep.subr.mxu0 %v1082
  %v1084 = vand.u32 %v91, 4294901760
  %1085 = vmatpush1.xpose.msra.mxu0 %v1084
  %v1086 = vand.u32 %v94, 4294901760
  %1087 = vmatprep.subr.mxu0 %v1086
  %v1088 = vand.u32 %v93, 4294901760
  %1089 = vmatpush1.xpose.msra.mxu0 %v1088
  %v1090 = vand.u32 %v96, 4294901760
  %1091 = vmatprep.subr.mxu0 %v1090
  %v1092 = vand.u32 %v95, 4294901760
  %1093 = vmatpush1.xpose.msra.mxu0 %v1092
  %v1094 = vand.u32 %v98, 4294901760
  %1095 = vmatprep.subr.mxu0 %v1094
  %v1096 = vand.u32 %v97, 4294901760
  %1097 = vmatpush1.xpose.msra.mxu0 %v1096
  %v1098 = vand.u32 %v100, 4294901760
  %1099 = vmatprep.subr.mxu0 %v1098
  %v1100 = vand.u32 %v99, 4294901760
  %1101 = vmatpush1.xpose.msra.mxu0 %v1100
  %v1102 = vand.u32 %v102, 4294901760
  %1103 = vmatprep.subr.mxu0 %v1102
  %v1104 = vand.u32 %v101, 4294901760
  %1105 = vmatpush1.xpose.msra.mxu0 %v1104
  %v1106 = vand.u32 %v104, 4294901760
  %1107 = vmatprep.subr.mxu0 %v1106
  %v1108 = vand.u32 %v103, 4294901760
  %1109 = vmatpush1.xpose.msra.mxu0 %v1108
  %v1110 = vand.u32 %v106, 4294901760
  %1111 = vmatprep.subr.mxu0 %v1110
  %v1112 = vand.u32 %v105, 4294901760
  %1113 = vmatpush1.xpose.msra.mxu0 %v1112
  %v1114 = vand.u32 %v108, 4294901760
  %1115 = vmatprep.subr.mxu0 %v1114
  %v1116 = vand.u32 %v107, 4294901760
  %1117 = vmatpush1.xpose.msra.mxu0 %v1116
  %v1118 = vand.u32 %v110, 4294901760
  %1119 = vmatprep.subr.mxu0 %v1118
  %v1120 = vand.u32 %v109, 4294901760
  %1121 = vmatpush1.xpose.msra.mxu0 %v1120
  %1122 = vmatprep.subr.mxu0 0.0
  %1123 = vmatpush1.xpose.msra.mxu0 0.0
  %1124 = vmatprep.subr.mxu0 0.0
  %1125 = vmatpush1.xpose.msra.mxu0 0.0
  %1126 = vmatprep.subr.mxu0 0.0
  %1127 = vmatpush1.xpose.msra.mxu0 0.0
  %1128 = vmatprep.subr.mxu0 0.0
  %1129 = vmatpush1.xpose.msra.mxu0 0.0
  %1130 = vmatprep.subr.mxu0 0.0
  %1131 = vmatpush1.xpose.msra.mxu0 0.0
  %1132 = vmatprep.subr.mxu0 0.0
  %1133 = vmatpush1.xpose.msra.mxu0 0.0
  %1134 = vmatprep.subr.mxu0 0.0
  %1135 = vmatpush1.xpose.msra.mxu0 0.0
  %1136 = vmatprep.subr.mxu0 0.0
  %1137 = vmatpush1.xpose.msra.mxu0 0.0
  %1138 = vmatprep.subr.mxu0 0.0
  %1139 = vmatpush1.xpose.msra.mxu0 0.0
  %1140 = vmatprep.subr.mxu0 0.0
  %1141 = vmatpush1.xpose.msra.mxu0 0.0
  %1142 = vmatprep.subr.mxu0 0.0
  %1143 = vmatpush1.xpose.msra.mxu0 0.0
  %1144 = vmatprep.subr.mxu0 0.0
  %1145 = vmatpush1.xpose.msra.mxu0 0.0
  %1146 = vmatprep.subr.mxu0 0.0
  %1147 = vmatpush1.xpose.msra.mxu0 0.0
  %1148 = vmatprep.subr.mxu0 0.0
  %1149 = vmatpush1.xpose.msra.mxu0 0.0
  %1150 = vmatprep.subr.mxu0 0.0
  %1151 = vmatpush1.xpose.msra.mxu0 0.0
  %1152 = vmatprep.subr.mxu0 0.0
  %1153 = vmatpush1.xpose.msra.mxu0 0.0
  %v1154 = vand.u32 %v48, 4294901760
  %v1155 = vsub.f32 %v48, %v1154
  %v1156 = vand.u32 %v1155, 4294901760
  %1157 = vmatprep.mubr.f32.mxu0 %v1156
  %v1158 = vand.u32 %v47, 4294901760
  %v1159 = vsub.f32 %v47, %v1158
  %v1160 = vand.u32 %v1159, 4294901760
  %1161 = vmatmul.mubr.f32.gmra.mrb[0].mxu0 %v1160
  %v1162 = vpop.f32.mrb[0].mxu0
  %v1163 = vadd.f32 %v920, %v1162
  %v1164 = vpop.f32.mrb[0].mxu0
  %v1165 = vand.u32 %v50, 4294901760
  %v1166 = vsub.f32 %v50, %v1165
  %v1167 = vand.u32 %v1166, 4294901760
  %1168 = vmatprep.mubr.f32.mxu0 %v1167
  %v1169 = vand.u32 %v49, 4294901760
  %v1170 = vsub.f32 %v49, %v1169
  %v1171 = vand.u32 %v1170, 4294901760
  %1172 = vmatmul.mubr.f32.gmra.mrb[0].mxu0 %v1171
  %v1173 = vpop.f32.mrb[0].mxu0
  %v1174 = vadd.f32 %v929, %v1173
  %v1175 = vpop.f32.mrb[0].mxu0
  %v1176 = vand.u32 %v52, 4294901760
  %v1177 = vsub.f32 %v52, %v1176
  %v1178 = vand.u32 %v1177, 4294901760
  %1179 = vmatprep.mubr.f32.mxu0 %v1178
  %v1180 = vand.u32 %v51, 4294901760
  %v1181 = vsub.f32 %v51, %v1180
  %v1182 = vand.u32 %v1181, 4294901760
  %1183 = vmatmul.mubr.f32.gmra.mrb[0].mxu0 %v1182
  %v1184 = vpop.f32.mrb[0].mxu0
  %v1185 = vadd.f32 %v938, %v1184
  %v1186 = vpop.f32.mrb[0].mxu0
  %v1187 = vand.u32 %v54, 4294901760
  %v1188 = vsub.f32 %v54, %v1187
  %v1189 = vand.u32 %v1188, 4294901760
  %1190 = vmatprep.mubr.f32.mxu0 %v1189
  %v1191 = vand.u32 %v53, 4294901760
  %v1192 = vsub.f32 %v53, %v1191
  %v1193 = vand.u32 %v1192, 4294901760
  %1194 = vmatmul.mubr.f32.gmra.mrb[0].mxu0 %v1193
  %v1195 = vpop.f32.mrb[0].mxu0
  %v1196 = vadd.f32 %v947, %v1195
  %v1197 = vpop.f32.mrb[0].mxu0
  %v1198 = vand.u32 %v56, 4294901760
  %v1199 = vsub.f32 %v56, %v1198
  %v1200 = vand.u32 %v1199, 4294901760
  %1201 = vmatprep.mubr.f32.mxu0 %v1200
  %v1202 = vand.u32 %v55, 4294901760
  %v1203 = vsub.f32 %v55, %v1202
  %v1204 = vand.u32 %v1203, 4294901760
  %1205 = vmatmul.mubr.f32.gmra.mrb[0].mxu0 %v1204
  %v1206 = vpop.f32.mrb[0].mxu0
  %v1207 = vadd.f32 %v956, %v1206
  %v1208 = vpop.f32.mrb[0].mxu0
  %v1209 = vand.u32 %v58, 4294901760
  %v1210 = vsub.f32 %v58, %v1209
  %v1211 = vand.u32 %v1210, 4294901760
  %1212 = vmatprep.mubr.f32.mxu0 %v1211
  %v1213 = vand.u32 %v57, 4294901760
  %v1214 = vsub.f32 %v57, %v1213
  %v1215 = vand.u32 %v1214, 4294901760
  %1216 = vmatmul.mubr.f32.gmra.mrb[0].mxu0 %v1215
  %v1217 = vpop.f32.mrb[0].mxu0
  %v1218 = vadd.f32 %v965, %v1217
  %v1219 = vpop.f32.mrb[0].mxu0
  %v1220 = vand.u32 %v60, 4294901760
  %v1221 = vsub.f32 %v60, %v1220
  %v1222 = vand.u32 %v1221, 4294901760
  %1223 = vmatprep.mubr.f32.mxu0 %v1222
  %v1224 = vand.u32 %v59, 4294901760
  %v1225 = vsub.f32 %v59, %v1224
  %v1226 = vand.u32 %v1225, 4294901760
  %1227 = vmatmul.mubr.f32.gmra.mrb[0].mxu0 %v1226
  %v1228 = vpop.f32.mrb[0].mxu0
  %v1229 = vadd.f32 %v974, %v1228
  %v1230 = vpop.f32.mrb[0].mxu0
  %v1231 = vand.u32 %v62, 4294901760
  %v1232 = vsub.f32 %v62, %v1231
  %v1233 = vand.u32 %v1232, 4294901760
  %1234 = vmatprep.mubr.f32.mxu0 %v1233
  %v1235 = vand.u32 %v61, 4294901760
  %v1236 = vsub.f32 %v61, %v1235
  %v1237 = vand.u32 %v1236, 4294901760
  %1238 = vmatmul.mubr.f32.gmra.mrb[0].mxu0 %v1237
  %v1239 = vpop.f32.mrb[0].mxu0
  %v1240 = vadd.f32 %v983, %v1239
  %v1241 = vpop.f32.mrb[0].mxu0
  %v1242 = vand.u32 %v64, 4294901760
  %v1243 = vsub.f32 %v64, %v1242
  %v1244 = vand.u32 %v1243, 4294901760
  %1245 = vmatprep.mubr.f32.mxu0 %v1244
  %v1246 = vand.u32 %v63, 4294901760
  %v1247 = vsub.f32 %v63, %v1246
  %v1248 = vand.u32 %v1247, 4294901760
  %1249 = vmatmul.mubr.f32.gmra.mrb[0].mxu0 %v1248
  %v1250 = vpop.f32.mrb[0].mxu0
  %v1251 = vadd.f32 %v992, %v1250
  %v1252 = vpop.f32.mrb[0].mxu0
  %v1253 = vand.u32 %v66, 4294901760
  %v1254 = vsub.f32 %v66, %v1253
  %v1255 = vand.u32 %v1254, 4294901760
  %1256 = vmatprep.mubr.f32.mxu0 %v1255
  %v1257 = vand.u32 %v65, 4294901760
  %v1258 = vsub.f32 %v65, %v1257
  %v1259 = vand.u32 %v1258, 4294901760
  %1260 = vmatmul.mubr.f32.gmra.mrb[0].mxu0 %v1259
  %v1261 = vpop.f32.mrb[0].mxu0
  %v1262 = vadd.f32 %v1001, %v1261
  %v1263 = vpop.f32.mrb[0].mxu0
  %v1264 = vand.u32 %v68, 4294901760
  %v1265 = vsub.f32 %v68, %v1264
  %v1266 = vand.u32 %v1265, 4294901760
  %1267 = vmatprep.mubr.f32.mxu0 %v1266
  %v1268 = vand.u32 %v67, 4294901760
  %v1269 = vsub.f32 %v67, %v1268
  %v1270 = vand.u32 %v1269, 4294901760
  %1271 = vmatmul.mubr.f32.gmra.mrb[0].mxu0 %v1270
  %v1272 = vpop.f32.mrb[0].mxu0
  %v1273 = vadd.f32 %v1010, %v1272
  %v1274 = vpop.f32.mrb[0].mxu0
  %v1275 = vand.u32 %v70, 4294901760
  %v1276 = vsub.f32 %v70, %v1275
  %v1277 = vand.u32 %v1276, 4294901760
  %1278 = vmatprep.mubr.f32.mxu0 %v1277
  %v1279 = vand.u32 %v69, 4294901760
  %v1280 = vsub.f32 %v69, %v1279
  %v1281 = vand.u32 %v1280, 4294901760
  %1282 = vmatmul.mubr.f32.gmra.mrb[0].mxu0 %v1281
  %v1283 = vpop.f32.mrb[0].mxu0
  %v1284 = vadd.f32 %v1019, %v1283
  %v1285 = vpop.f32.mrb[0].mxu0
  %v1286 = vand.u32 %v72, 4294901760
  %v1287 = vsub.f32 %v72, %v1286
  %v1288 = vand.u32 %v1287, 4294901760
  %1289 = vmatprep.mubr.f32.mxu0 %v1288
  %v1290 = vand.u32 %v71, 4294901760
  %v1291 = vsub.f32 %v71, %v1290
  %v1292 = vand.u32 %v1291, 4294901760
  %1293 = vmatmul.mubr.f32.gmra.mrb[0].mxu0 %v1292
  %v1294 = vpop.f32.mrb[0].mxu0
  %v1295 = vadd.f32 %v1028, %v1294
  %v1296 = vpop.f32.mrb[0].mxu0
  %v1297 = vand.u32 %v74, 4294901760
  %v1298 = vsub.f32 %v74, %v1297
  %v1299 = vand.u32 %v1298, 4294901760
  %1300 = vmatprep.mubr.f32.mxu0 %v1299
  %v1301 = vand.u32 %v73, 4294901760
  %v1302 = vsub.f32 %v73, %v1301
  %v1303 = vand.u32 %v1302, 4294901760
  %1304 = vmatmul.mubr.f32.gmra.mrb[0].mxu0 %v1303
  %v1305 = vpop.f32.mrb[0].mxu0
  %v1306 = vadd.f32 %v1037, %v1305
  %v1307 = vpop.f32.mrb[0].mxu0
  %v1308 = vand.u32 %v76, 4294901760
  %v1309 = vsub.f32 %v76, %v1308
  %v1310 = vand.u32 %v1309, 4294901760
  %1311 = vmatprep.mubr.f32.mxu0 %v1310
  %v1312 = vand.u32 %v75, 4294901760
  %v1313 = vsub.f32 %v75, %v1312
  %v1314 = vand.u32 %v1313, 4294901760
  %1315 = vmatmul.mubr.f32.gmra.mrb[0].mxu0 %v1314
  %v1316 = vpop.f32.mrb[0].mxu0
  %v1317 = vadd.f32 %v1046, %v1316
  %v1318 = vpop.f32.mrb[0].mxu0
  %v1319 = vand.u32 %v78, 4294901760
  %v1320 = vsub.f32 %v78, %v1319
  %v1321 = vand.u32 %v1320, 4294901760
  %1322 = vmatprep.mubr.f32.mxu0 %v1321
  %v1323 = vand.u32 %v77, 4294901760
  %v1324 = vsub.f32 %v77, %v1323
  %v1325 = vand.u32 %v1324, 4294901760
  %1326 = vmatmul.mubr.f32.gmra.mrb[0].mxu0 %v1325
  %v1327 = vpop.f32.mrb[0].mxu0
  %v1328 = vadd.f32 %v1055, %v1327
  %v1329 = vpop.f32.mrb[0].mxu0
  %1330 = vdwg.mxu0
  %v1331 = vand.u32 %v80, 4294901760
  %v1332 = vsub.f32 %v80, %v1331
  %v1333 = vand.u32 %v1332, 4294901760
  %1334 = vmatprep.subr.mxu0 %v1333
  %v1335 = vand.u32 %v79, 4294901760
  %v1336 = vsub.f32 %v79, %v1335
  %v1337 = vand.u32 %v1336, 4294901760
  %1338 = vmatpush1.xpose.msra.mxu0 %v1337
  %v1339 = vand.u32 %v82, 4294901760
  %v1340 = vsub.f32 %v82, %v1339
  %v1341 = vand.u32 %v1340, 4294901760
  %1342 = vmatprep.subr.mxu0 %v1341
  %v1343 = vand.u32 %v81, 4294901760
  %v1344 = vsub.f32 %v81, %v1343
  %v1345 = vand.u32 %v1344, 4294901760
  %1346 = vmatpush1.xpose.msra.mxu0 %v1345
  %v1347 = vand.u32 %v84, 4294901760
  %v1348 = vsub.f32 %v84, %v1347
  %v1349 = vand.u32 %v1348, 4294901760
  %1350 = vmatprep.subr.mxu0 %v1349
  %v1351 = vand.u32 %v83, 4294901760
  %v1352 = vsub.f32 %v83, %v1351
  %v1353 = vand.u32 %v1352, 4294901760
  %1354 = vmatpush1.xpose.msra.mxu0 %v1353
  %v1355 = vand.u32 %v86, 4294901760
  %v1356 = vsub.f32 %v86, %v1355
  %v1357 = vand.u32 %v1356, 4294901760
  %1358 = vmatprep.subr.mxu0 %v1357
  %v1359 = vand.u32 %v85, 4294901760
  %v1360 = vsub.f32 %v85, %v1359
  %v1361 = vand.u32 %v1360, 4294901760
  %1362 = vmatpush1.xpose.msra.mxu0 %v1361
  %v1363 = vand.u32 %v88, 4294901760
  %v1364 = vsub.f32 %v88, %v1363
  %v1365 = vand.u32 %v1364, 4294901760
  %1366 = vmatprep.subr.mxu0 %v1365
  %v1367 = vand.u32 %v87, 4294901760
  %v1368 = vsub.f32 %v87, %v1367
  %v1369 = vand.u32 %v1368, 4294901760
  %1370 = vmatpush1.xpose.msra.mxu0 %v1369
  %v1371 = vand.u32 %v90, 4294901760
  %v1372 = vsub.f32 %v90, %v1371
  %v1373 = vand.u32 %v1372, 4294901760
  %1374 = vmatprep.subr.mxu0 %v1373
  %v1375 = vand.u32 %v89, 4294901760
  %v1376 = vsub.f32 %v89, %v1375
  %v1377 = vand.u32 %v1376, 4294901760
  %1378 = vmatpush1.xpose.msra.mxu0 %v1377
  %v1379 = vand.u32 %v92, 4294901760
  %v1380 = vsub.f32 %v92, %v1379
  %v1381 = vand.u32 %v1380, 4294901760
  %1382 = vmatprep.subr.mxu0 %v1381
  %v1383 = vand.u32 %v91, 4294901760
  %v1384 = vsub.f32 %v91, %v1383
  %v1385 = vand.u32 %v1384, 4294901760
  %1386 = vmatpush1.xpose.msra.mxu0 %v1385
  %v1387 = vand.u32 %v94, 4294901760
  %v1388 = vsub.f32 %v94, %v1387
  %v1389 = vand.u32 %v1388, 4294901760
  %1390 = vmatprep.subr.mxu0 %v1389
  %v1391 = vand.u32 %v93, 4294901760
  %v1392 = vsub.f32 %v93, %v1391
  %v1393 = vand.u32 %v1392, 4294901760
  %1394 = vmatpush1.xpose.msra.mxu0 %v1393
  %v1395 = vand.u32 %v96, 4294901760
  %v1396 = vsub.f32 %v96, %v1395
  %v1397 = vand.u32 %v1396, 4294901760
  %1398 = vmatprep.subr.mxu0 %v1397
  %v1399 = vand.u32 %v95, 4294901760
  %v1400 = vsub.f32 %v95, %v1399
  %v1401 = vand.u32 %v1400, 4294901760
  %1402 = vmatpush1.xpose.msra.mxu0 %v1401
  %v1403 = vand.u32 %v98, 4294901760
  %v1404 = vsub.f32 %v98, %v1403
  %v1405 = vand.u32 %v1404, 4294901760
  %1406 = vmatprep.subr.mxu0 %v1405
  %v1407 = vand.u32 %v97, 4294901760
  %v1408 = vsub.f32 %v97, %v1407
  %v1409 = vand.u32 %v1408, 4294901760
  %1410 = vmatpush1.xpose.msra.mxu0 %v1409
  %v1411 = vand.u32 %v100, 4294901760
  %v1412 = vsub.f32 %v100, %v1411
  %v1413 = vand.u32 %v1412, 4294901760
  %1414 = vmatprep.subr.mxu0 %v1413
  %v1415 = vand.u32 %v99, 4294901760
  %v1416 = vsub.f32 %v99, %v1415
  %v1417 = vand.u32 %v1416, 4294901760
  %1418 = vmatpush1.xpose.msra.mxu0 %v1417
  %v1419 = vand.u32 %v102, 4294901760
  %v1420 = vsub.f32 %v102, %v1419
  %v1421 = vand.u32 %v1420, 4294901760
  %1422 = vmatprep.subr.mxu0 %v1421
  %v1423 = vand.u32 %v101, 4294901760
  %v1424 = vsub.f32 %v101, %v1423
  %v1425 = vand.u32 %v1424, 4294901760
  %1426 = vmatpush1.xpose.msra.mxu0 %v1425
  %v1427 = vand.u32 %v104, 4294901760
  %v1428 = vsub.f32 %v104, %v1427
  %v1429 = vand.u32 %v1428, 4294901760
  %1430 = vmatprep.subr.mxu0 %v1429
  %v1431 = vand.u32 %v103, 4294901760
  %v1432 = vsub.f32 %v103, %v1431
  %v1433 = vand.u32 %v1432, 4294901760
  %1434 = vmatpush1.xpose.msra.mxu0 %v1433
  %v1435 = vand.u32 %v106, 4294901760
  %v1436 = vsub.f32 %v106, %v1435
  %v1437 = vand.u32 %v1436, 4294901760
  %1438 = vmatprep.subr.mxu0 %v1437
  %v1439 = vand.u32 %v105, 4294901760
  %v1440 = vsub.f32 %v105, %v1439
  %v1441 = vand.u32 %v1440, 4294901760
  %1442 = vmatpush1.xpose.msra.mxu0 %v1441
  %v1443 = vand.u32 %v108, 4294901760
  %v1444 = vsub.f32 %v108, %v1443
  %v1445 = vand.u32 %v1444, 4294901760
  %1446 = vmatprep.subr.mxu0 %v1445
  %v1447 = vand.u32 %v107, 4294901760
  %v1448 = vsub.f32 %v107, %v1447
  %v1449 = vand.u32 %v1448, 4294901760
  %1450 = vmatpush1.xpose.msra.mxu0 %v1449
  %v1451 = vand.u32 %v110, 4294901760
  %v1452 = vsub.f32 %v110, %v1451
  %v1453 = vand.u32 %v1452, 4294901760
  %1454 = vmatprep.subr.mxu0 %v1453
  %v1455 = vand.u32 %v109, 4294901760
  %v1456 = vsub.f32 %v109, %v1455
  %v1457 = vand.u32 %v1456, 4294901760
  %1458 = vmatpush1.xpose.msra.mxu0 %v1457
  %1459 = vmatprep.subr.mxu0 0.0
  %1460 = vmatpush1.xpose.msra.mxu0 0.0
  %1461 = vmatprep.subr.mxu0 0.0
  %1462 = vmatpush1.xpose.msra.mxu0 0.0
  %1463 = vmatprep.subr.mxu0 0.0
  %1464 = vmatpush1.xpose.msra.mxu0 0.0
  %1465 = vmatprep.subr.mxu0 0.0
  %1466 = vmatpush1.xpose.msra.mxu0 0.0
  %1467 = vmatprep.subr.mxu0 0.0
  %1468 = vmatpush1.xpose.msra.mxu0 0.0
  %1469 = vmatprep.subr.mxu0 0.0
  %1470 = vmatpush1.xpose.msra.mxu0 0.0
  %1471 = vmatprep.subr.mxu0 0.0
  %1472 = vmatpush1.xpose.msra.mxu0 0.0
  %1473 = vmatprep.subr.mxu0 0.0
  %1474 = vmatpush1.xpose.msra.mxu0 0.0
  %1475 = vmatprep.subr.mxu0 0.0
  %1476 = vmatpush1.xpose.msra.mxu0 0.0
  %1477 = vmatprep.subr.mxu0 0.0
  %1478 = vmatpush1.xpose.msra.mxu0 0.0
  %1479 = vmatprep.subr.mxu0 0.0
  %1480 = vmatpush1.xpose.msra.mxu0 0.0
  %1481 = vmatprep.subr.mxu0 0.0
  %1482 = vmatpush1.xpose.msra.mxu0 0.0
  %1483 = vmatprep.subr.mxu0 0.0
  %1484 = vmatpush1.xpose.msra.mxu0 0.0
  %1485 = vmatprep.subr.mxu0 0.0
  %1486 = vmatpush1.xpose.msra.mxu0 0.0
  %1487 = vmatprep.subr.mxu0 0.0
  %1488 = vmatpush1.xpose.msra.mxu0 0.0
  %1489 = vmatprep.subr.mxu0 0.0
  %1490 = vmatpush1.xpose.msra.mxu0 0.0
  %v1491 = vand.u32 %v48, 4294901760
  %1492 = vmatprep.mubr.f32.mxu0 %v1491
  %v1493 = vand.u32 %v47, 4294901760
  %1494 = vmatmul.mubr.f32.gmra.mrb[0].mxu0 %v1493
  %v1495 = vpop.f32.mrb[0].mxu0
  %v1496 = vadd.f32 %v1163, %v1495
  %v1497 = vpop.f32.mrb[0].mxu0
  %v1498 = vand.u32 %v50, 4294901760
  %1499 = vmatprep.mubr.f32.mxu0 %v1498
  %v1500 = vand.u32 %v49, 4294901760
  %1501 = vmatmul.mubr.f32.gmra.mrb[0].mxu0 %v1500
  %v1502 = vpop.f32.mrb[0].mxu0
  %v1503 = vadd.f32 %v1174, %v1502
  %v1504 = vpop.f32.mrb[0].mxu0
  %v1505 = vand.u32 %v52, 4294901760
  %1506 = vmatprep.mubr.f32.mxu0 %v1505
  %v1507 = vand.u32 %v51, 4294901760
  %1508 = vmatmul.mubr.f32.gmra.mrb[0].mxu0 %v1507
  %v1509 = vpop.f32.mrb[0].mxu0
  %v1510 = vadd.f32 %v1185, %v1509
  %v1511 = vpop.f32.mrb[0].mxu0
  %v1512 = vand.u32 %v54, 4294901760
  %1513 = vmatprep.mubr.f32.mxu0 %v1512
  %v1514 = vand.u32 %v53, 4294901760
  %1515 = vmatmul.mubr.f32.gmra.mrb[0].mxu0 %v1514
  %v1516 = vpop.f32.mrb[0].mxu0
  %v1517 = vadd.f32 %v1196, %v1516
  %v1518 = vpop.f32.mrb[0].mxu0
  %v1519 = vand.u32 %v56, 4294901760
  %1520 = vmatprep.mubr.f32.mxu0 %v1519
  %v1521 = vand.u32 %v55, 4294901760
  %1522 = vmatmul.mubr.f32.gmra.mrb[0].mxu0 %v1521
  %v1523 = vpop.f32.mrb[0].mxu0
  %v1524 = vadd.f32 %v1207, %v1523
  %v1525 = vpop.f32.mrb[0].mxu0
  %v1526 = vand.u32 %v58, 4294901760
  %1527 = vmatprep.mubr.f32.mxu0 %v1526
  %v1528 = vand.u32 %v57, 4294901760
  %1529 = vmatmul.mubr.f32.gmra.mrb[0].mxu0 %v1528
  %v1530 = vpop.f32.mrb[0].mxu0
  %v1531 = vadd.f32 %v1218, %v1530
  %v1532 = vpop.f32.mrb[0].mxu0
  %v1533 = vand.u32 %v60, 4294901760
  %1534 = vmatprep.mubr.f32.mxu0 %v1533
  %v1535 = vand.u32 %v59, 4294901760
  %1536 = vmatmul.mubr.f32.gmra.mrb[0].mxu0 %v1535
  %v1537 = vpop.f32.mrb[0].mxu0
  %v1538 = vadd.f32 %v1229, %v1537
  %v1539 = vpop.f32.mrb[0].mxu0
  %v1540 = vand.u32 %v62, 4294901760
  %1541 = vmatprep.mubr.f32.mxu0 %v1540
  %v1542 = vand.u32 %v61, 4294901760
  %1543 = vmatmul.mubr.f32.gmra.mrb[0].mxu0 %v1542
  %v1544 = vpop.f32.mrb[0].mxu0
  %v1545 = vadd.f32 %v1240, %v1544
  %v1546 = vpop.f32.mrb[0].mxu0
  %v1547 = vand.u32 %v64, 4294901760
  %1548 = vmatprep.mubr.f32.mxu0 %v1547
  %v1549 = vand.u32 %v63, 4294901760
  %1550 = vmatmul.mubr.f32.gmra.mrb[0].mxu0 %v1549
  %v1551 = vpop.f32.mrb[0].mxu0
  %v1552 = vadd.f32 %v1251, %v1551
  %v1553 = vpop.f32.mrb[0].mxu0
  %v1554 = vand.u32 %v66, 4294901760
  %1555 = vmatprep.mubr.f32.mxu0 %v1554
  %v1556 = vand.u32 %v65, 4294901760
  %1557 = vmatmul.mubr.f32.gmra.mrb[0].mxu0 %v1556
  %v1558 = vpop.f32.mrb[0].mxu0
  %v1559 = vadd.f32 %v1262, %v1558
  %v1560 = vpop.f32.mrb[0].mxu0
  %v1561 = vand.u32 %v68, 4294901760
  %1562 = vmatprep.mubr.f32.mxu0 %v1561
  %v1563 = vand.u32 %v67, 4294901760
  %1564 = vmatmul.mubr.f32.gmra.mrb[0].mxu0 %v1563
  %v1565 = vpop.f32.mrb[0].mxu0
  %v1566 = vadd.f32 %v1273, %v1565
  %v1567 = vpop.f32.mrb[0].mxu0
  %v1568 = vand.u32 %v70, 4294901760
  %1569 = vmatprep.mubr.f32.mxu0 %v1568
  %v1570 = vand.u32 %v69, 4294901760
  %1571 = vmatmul.mubr.f32.gmra.mrb[0].mxu0 %v1570
  %v1572 = vpop.f32.mrb[0].mxu0
  %v1573 = vadd.f32 %v1284, %v1572
  %v1574 = vpop.f32.mrb[0].mxu0
  %v1575 = vand.u32 %v72, 4294901760
  %1576 = vmatprep.mubr.f32.mxu0 %v1575
  %v1577 = vand.u32 %v71, 4294901760
  %1578 = vmatmul.mubr.f32.gmra.mrb[0].mxu0 %v1577
  %v1579 = vpop.f32.mrb[0].mxu0
  %v1580 = vadd.f32 %v1295, %v1579
  %v1581 = vpop.f32.mrb[0].mxu0
  %v1582 = vand.u32 %v74, 4294901760
  %1583 = vmatprep.mubr.f32.mxu0 %v1582
  %v1584 = vand.u32 %v73, 4294901760
  %1585 = vmatmul.mubr.f32.gmra.mrb[0].mxu0 %v1584
  %v1586 = vpop.f32.mrb[0].mxu0
  %v1587 = vadd.f32 %v1306, %v1586
  %v1588 = vpop.f32.mrb[0].mxu0
  %v1589 = vand.u32 %v76, 4294901760
  %1590 = vmatprep.mubr.f32.mxu0 %v1589
  %v1591 = vand.u32 %v75, 4294901760
  %1592 = vmatmul.mubr.f32.gmra.mrb[0].mxu0 %v1591
  %v1593 = vpop.f32.mrb[0].mxu0
  %v1594 = vadd.f32 %v1317, %v1593
  %v1595 = vpop.f32.mrb[0].mxu0
  %v1596 = vand.u32 %v78, 4294901760
  %1597 = vmatprep.mubr.f32.mxu0 %v1596
  %v1598 = vand.u32 %v77, 4294901760
  %1599 = vmatmul.mubr.f32.gmra.mrb[0].mxu0 %v1598
  %v1600 = vpop.f32.mrb[0].mxu0
  %v1601 = vadd.f32 %v1328, %v1600
  %v1602 = vpop.f32.mrb[0].mxu0
  %1603 = vdwg.mxu0
  %v1604 = vand.u32 %v80, 4294901760
  %1605 = vmatprep.subr.mxu0 %v1604
  %v1606 = vand.u32 %v79, 4294901760
  %1607 = vmatpush1.xpose.msra.mxu0 %v1606
  %v1608 = vand.u32 %v82, 4294901760
  %1609 = vmatprep.subr.mxu0 %v1608
  %v1610 = vand.u32 %v81, 4294901760
  %1611 = vmatpush1.xpose.msra.mxu0 %v1610
  %v1612 = vand.u32 %v84, 4294901760
  %1613 = vmatprep.subr.mxu0 %v1612
  %v1614 = vand.u32 %v83, 4294901760
  %1615 = vmatpush1.xpose.msra.mxu0 %v1614
  %v1616 = vand.u32 %v86, 4294901760
  %1617 = vmatprep.subr.mxu0 %v1616
  %v1618 = vand.u32 %v85, 4294901760
  %1619 = vmatpush1.xpose.msra.mxu0 %v1618
  %v1620 = vand.u32 %v88, 4294901760
  %1621 = vmatprep.subr.mxu0 %v1620
  %v1622 = vand.u32 %v87, 4294901760
  %1623 = vmatpush1.xpose.msra.mxu0 %v1622
  %v1624 = vand.u32 %v90, 4294901760
  %1625 = vmatprep.subr.mxu0 %v1624
  %v1626 = vand.u32 %v89, 4294901760
  %1627 = vmatpush1.xpose.msra.mxu0 %v1626
  %v1628 = vand.u32 %v92, 4294901760
  %1629 = vmatprep.subr.mxu0 %v1628
  %v1630 = vand.u32 %v91, 4294901760
  %1631 = vmatpush1.xpose.msra.mxu0 %v1630
  %v1632 = vand.u32 %v94, 4294901760
  %1633 = vmatprep.subr.mxu0 %v1632
  %v1634 = vand.u32 %v93, 4294901760
  %1635 = vmatpush1.xpose.msra.mxu0 %v1634
  %v1636 = vand.u32 %v96, 4294901760
  %1637 = vmatprep.subr.mxu0 %v1636
  %v1638 = vand.u32 %v95, 4294901760
  %1639 = vmatpush1.xpose.msra.mxu0 %v1638
  %v1640 = vand.u32 %v98, 4294901760
  %1641 = vmatprep.subr.mxu0 %v1640
  %v1642 = vand.u32 %v97, 4294901760
  %1643 = vmatpush1.xpose.msra.mxu0 %v1642
  %v1644 = vand.u32 %v100, 4294901760
  %1645 = vmatprep.subr.mxu0 %v1644
  %v1646 = vand.u32 %v99, 4294901760
  %1647 = vmatpush1.xpose.msra.mxu0 %v1646
  %v1648 = vand.u32 %v102, 4294901760
  %1649 = vmatprep.subr.mxu0 %v1648
  %v1650 = vand.u32 %v101, 4294901760
  %1651 = vmatpush1.xpose.msra.mxu0 %v1650
  %v1652 = vand.u32 %v104, 4294901760
  %1653 = vmatprep.subr.mxu0 %v1652
  %v1654 = vand.u32 %v103, 4294901760
  %1655 = vmatpush1.xpose.msra.mxu0 %v1654
  %v1656 = vand.u32 %v106, 4294901760
  %1657 = vmatprep.subr.mxu0 %v1656
  %v1658 = vand.u32 %v105, 4294901760
  %1659 = vmatpush1.xpose.msra.mxu0 %v1658
  %v1660 = vand.u32 %v108, 4294901760
  %1661 = vmatprep.subr.mxu0 %v1660
  %v1662 = vand.u32 %v107, 4294901760
  %1663 = vmatpush1.xpose.msra.mxu0 %v1662
  %v1664 = vand.u32 %v110, 4294901760
  %1665 = vmatprep.subr.mxu0 %v1664
  %v1666 = vand.u32 %v109, 4294901760
  %1667 = vmatpush1.xpose.msra.mxu0 %v1666
  %1668 = vmatprep.subr.mxu0 0.0
  %1669 = vmatpush1.xpose.msra.mxu0 0.0
  %1670 = vmatprep.subr.mxu0 0.0
  %1671 = vmatpush1.xpose.msra.mxu0 0.0
  %1672 = vmatprep.subr.mxu0 0.0
  %1673 = vmatpush1.xpose.msra.mxu0 0.0
  %1674 = vmatprep.subr.mxu0 0.0
  %1675 = vmatpush1.xpose.msra.mxu0 0.0
  %1676 = vmatprep.subr.mxu0 0.0
  %1677 = vmatpush1.xpose.msra.mxu0 0.0
  %1678 = vmatprep.subr.mxu0 0.0
  %1679 = vmatpush1.xpose.msra.mxu0 0.0
  %1680 = vmatprep.subr.mxu0 0.0
  %1681 = vmatpush1.xpose.msra.mxu0 0.0
  %1682 = vmatprep.subr.mxu0 0.0
  %1683 = vmatpush1.xpose.msra.mxu0 0.0
  %1684 = vmatprep.subr.mxu0 0.0
  %1685 = vmatpush1.xpose.msra.mxu0 0.0
  %1686 = vmatprep.subr.mxu0 0.0
  %1687 = vmatpush1.xpose.msra.mxu0 0.0
  %1688 = vmatprep.subr.mxu0 0.0
  %1689 = vmatpush1.xpose.msra.mxu0 0.0
  %1690 = vmatprep.subr.mxu0 0.0
  %1691 = vmatpush1.xpose.msra.mxu0 0.0
  %1692 = vmatprep.subr.mxu0 0.0
  %1693 = vmatpush1.xpose.msra.mxu0 0.0
  %1694 = vmatprep.subr.mxu0 0.0
  %1695 = vmatpush1.xpose.msra.mxu0 0.0
  %1696 = vmatprep.subr.mxu0 0.0
  %1697 = vmatpush1.xpose.msra.mxu0 0.0
  %1698 = vmatprep.subr.mxu0 0.0
  %1699 = vmatpush1.xpose.msra.mxu0 0.0
  %v1700 = vand.u32 %v48, 4294901760
  %1701 = vmatprep.mubr.f32.mxu0 %v1700
  %v1702 = vand.u32 %v47, 4294901760
  %1703 = vmatmul.mubr.f32.gmra.mrb[0].mxu0 %v1702
  %v1704 = vpop.f32.mrb[0].mxu0
  %v1705 = vadd.f32 %v1496, %v1704
  %v1706 = vpop.f32.mrb[0].mxu0
  %v1707 = vand.u32 %v50, 4294901760
  %1708 = vmatprep.mubr.f32.mxu0 %v1707
  %v1709 = vand.u32 %v49, 4294901760
  %1710 = vmatmul.mubr.f32.gmra.mrb[0].mxu0 %v1709
  %v1711 = vpop.f32.mrb[0].mxu0
  %v1712 = vadd.f32 %v1503, %v1711
  %v1713 = vpop.f32.mrb[0].mxu0
  %v1714 = vand.u32 %v52, 4294901760
  %1715 = vmatprep.mubr.f32.mxu0 %v1714
  %v1716 = vand.u32 %v51, 4294901760
  %1717 = vmatmul.mubr.f32.gmra.mrb[0].mxu0 %v1716
  %v1718 = vpop.f32.mrb[0].mxu0
  %v1719 = vadd.f32 %v1510, %v1718
  %v1720 = vpop.f32.mrb[0].mxu0
  %v1721 = vand.u32 %v54, 4294901760
  %1722 = vmatprep.mubr.f32.mxu0 %v1721
  %v1723 = vand.u32 %v53, 4294901760
  %1724 = vmatmul.mubr.f32.gmra.mrb[0].mxu0 %v1723
  %v1725 = vpop.f32.mrb[0].mxu0
  %v1726 = vadd.f32 %v1517, %v1725
  %v1727 = vpop.f32.mrb[0].mxu0
  %v1728 = vand.u32 %v56, 4294901760
  %1729 = vmatprep.mubr.f32.mxu0 %v1728
  %v1730 = vand.u32 %v55, 4294901760
  %1731 = vmatmul.mubr.f32.gmra.mrb[0].mxu0 %v1730
  %v1732 = vpop.f32.mrb[0].mxu0
  %v1733 = vadd.f32 %v1524, %v1732
  %v1734 = vpop.f32.mrb[0].mxu0
  %v1735 = vand.u32 %v58, 4294901760
  %1736 = vmatprep.mubr.f32.mxu0 %v1735
  %v1737 = vand.u32 %v57, 4294901760
  %1738 = vmatmul.mubr.f32.gmra.mrb[0].mxu0 %v1737
  %v1739 = vpop.f32.mrb[0].mxu0
  %v1740 = vadd.f32 %v1531, %v1739
  %v1741 = vpop.f32.mrb[0].mxu0
  %v1742 = vand.u32 %v60, 4294901760
  %1743 = vmatprep.mubr.f32.mxu0 %v1742
  %v1744 = vand.u32 %v59, 4294901760
  %1745 = vmatmul.mubr.f32.gmra.mrb[0].mxu0 %v1744
  %v1746 = vpop.f32.mrb[0].mxu0
  %v1747 = vadd.f32 %v1538, %v1746
  %v1748 = vpop.f32.mrb[0].mxu0
  %v1749 = vand.u32 %v62, 4294901760
  %1750 = vmatprep.mubr.f32.mxu0 %v1749
  %v1751 = vand.u32 %v61, 4294901760
  %1752 = vmatmul.mubr.f32.gmra.mrb[0].mxu0 %v1751
  %v1753 = vpop.f32.mrb[0].mxu0
  %v1754 = vadd.f32 %v1545, %v1753
  %v1755 = vpop.f32.mrb[0].mxu0
  %v1756 = vand.u32 %v64, 4294901760
  %1757 = vmatprep.mubr.f32.mxu0 %v1756
  %v1758 = vand.u32 %v63, 4294901760
  %1759 = vmatmul.mubr.f32.gmra.mrb[0].mxu0 %v1758
  %v1760 = vpop.f32.mrb[0].mxu0
  %v1761 = vadd.f32 %v1552, %v1760
  %v1762 = vpop.f32.mrb[0].mxu0
  %v1763 = vand.u32 %v66, 4294901760
  %1764 = vmatprep.mubr.f32.mxu0 %v1763
  %v1765 = vand.u32 %v65, 4294901760
  %1766 = vmatmul.mubr.f32.gmra.mrb[0].mxu0 %v1765
  %v1767 = vpop.f32.mrb[0].mxu0
  %v1768 = vadd.f32 %v1559, %v1767
  %v1769 = vpop.f32.mrb[0].mxu0
  %v1770 = vand.u32 %v68, 4294901760
  %1771 = vmatprep.mubr.f32.mxu0 %v1770
  %v1772 = vand.u32 %v67, 4294901760
  %1773 = vmatmul.mubr.f32.gmra.mrb[0].mxu0 %v1772
  %v1774 = vpop.f32.mrb[0].mxu0
  %v1775 = vadd.f32 %v1566, %v1774
  %v1776 = vpop.f32.mrb[0].mxu0
  %v1777 = vand.u32 %v70, 4294901760
  %1778 = vmatprep.mubr.f32.mxu0 %v1777
  %v1779 = vand.u32 %v69, 4294901760
  %1780 = vmatmul.mubr.f32.gmra.mrb[0].mxu0 %v1779
  %v1781 = vpop.f32.mrb[0].mxu0
  %v1782 = vadd.f32 %v1573, %v1781
  %v1783 = vpop.f32.mrb[0].mxu0
  %v1784 = vand.u32 %v72, 4294901760
  %1785 = vmatprep.mubr.f32.mxu0 %v1784
  %v1786 = vand.u32 %v71, 4294901760
  %1787 = vmatmul.mubr.f32.gmra.mrb[0].mxu0 %v1786
  %v1788 = vpop.f32.mrb[0].mxu0
  %v1789 = vadd.f32 %v1580, %v1788
  %v1790 = vpop.f32.mrb[0].mxu0
  %v1791 = vand.u32 %v74, 4294901760
  %1792 = vmatprep.mubr.f32.mxu0 %v1791
  %v1793 = vand.u32 %v73, 4294901760
  %1794 = vmatmul.mubr.f32.gmra.mrb[0].mxu0 %v1793
  %v1795 = vpop.f32.mrb[0].mxu0
  %v1796 = vadd.f32 %v1587, %v1795
  %v1797 = vpop.f32.mrb[0].mxu0
  %v1798 = vand.u32 %v76, 4294901760
  %1799 = vmatprep.mubr.f32.mxu0 %v1798
  %v1800 = vand.u32 %v75, 4294901760
  %1801 = vmatmul.mubr.f32.gmra.mrb[0].mxu0 %v1800
  %v1802 = vpop.f32.mrb[0].mxu0
  %v1803 = vadd.f32 %v1594, %v1802
  %v1804 = vpop.f32.mrb[0].mxu0
  %v1805 = vand.u32 %v78, 4294901760
  %1806 = vmatprep.mubr.f32.mxu0 %v1805
  %v1807 = vand.u32 %v77, 4294901760
  %1808 = vmatmul.mubr.f32.gmra.mrb[0].mxu0 %v1807
  %v1809 = vpop.f32.mrb[0].mxu0
  %v1810 = vadd.f32 %v1601, %v1809
  %v1811 = vpop.f32.mrb[0].mxu0
  %1812 = vdwg.mxu0
  %v1813 = vadd.f32 %v31, %v1705
  %v1814 = vadd.f32 %v32, %v1712
  %v1815 = vadd.f32 %v33, %v1719
  %v1816 = vadd.f32 %v34, %v1726
  %v1817 = vadd.f32 %v35, %v1733
  %v1818 = vadd.f32 %v36, %v1740
  %v1819 = vadd.f32 %v37, %v1747
  %v1820 = vadd.f32 %v38, %v1754
  %v1821 = vadd.f32 %v39, %v1761
  %v1822 = vadd.f32 %v40, %v1768
  %v1823 = vadd.f32 %v41, %v1775
  %v1824 = vadd.f32 %v42, %v1782
  %v1825 = vadd.f32 %v43, %v1789
  %v1826 = vadd.f32 %v44, %v1796
  %v1827 = vadd.f32 %v45, %v1803
  %v1828 = vadd.f32 %v46, %v1810
  %1829 = vst [vmem:[%s2] sm:$0xff] %v1813
  %1830 = vst [vmem:[%s2 + $0x8] sm:$0xff] %v1814
  %1831 = vst [vmem:[%s2 + $0x10] sm:$0xff] %v1815
  %1832 = vst [vmem:[%s2 + $0x18] sm:$0xff] %v1816
  %1833 = vst [vmem:[%s2 + $0x20] sm:$0xff] %v1817
  %1834 = vst [vmem:[%s2 + $0x28] sm:$0xff] %v1818
  %1835 = vst [vmem:[%s2 + $0x30] sm:$0xff] %v1819
  %1836 = vst [vmem:[%s2 + $0x38] sm:$0xff] %v1820
  %1837 = vst [vmem:[%s2 + $0x40] sm:$0xff] %v1821
  %1838 = vst [vmem:[%s2 + $0x48] sm:$0xff] %v1822
  %1839 = vst [vmem:[%s2 + $0x50] sm:$0xff] %v1823
  %1840 = vst [vmem:[%s2 + $0x58] sm:$0xff] %v1824
  %1841 = vst [vmem:[%s2 + $0x60] sm:$0xff] %v1825
  %1842 = vst [vmem:[%s2 + $0x68] sm:$0xff] %v1826
  %1843 = vst [vmem:[%s2 + $0x70] sm:$0xff] %v1827
  %1844 = vst [vmem:[%s2 + $0x78] sm:$0xff] %v1828
  // Predicated region
  $region14: #{linear_forward.1} parent=0 // pred_check
    _
  $region15: #{linear_forward.1} parent=0 // pred_check_branch
    %1846 = sbr.rel (0) target = $region17
  $region16: #{linear_forward.1} parent=0 // pred_region
    _
  $region17: #{linear_forward.1} parent=0 // pred_fallthru
    _
  // Predicated region
  $region18: #{linear_forward.1} parent=0 // pred_check
    _
  $region19: #{linear_forward.1} parent=0 // pred_check_branch
    %1848 = sbr.rel (0) target = $region21
  $region20: #{linear_forward.1} parent=0 // pred_region
    _
  $region21: #{linear_forward.1} parent=0 // pred_fallthru
    _

</llo_original>
